<compile_context>
chip_gen: v5e
topology: v5e:2x2
jax: 0.10.0
libtpu: 0.0.40
codegen_flags: <defaults>
</compile_context>

<pallas_src>
import functools
import math

import jax
import jax.numpy as jnp
from jax import lax
from jax.experimental import pallas as pl
from jax.experimental.pallas import tpu as pltpu

# ----------------------------- small PnGBert config -----------------------------
VOCAB = 50        # wordpiece vocab size (synthetic)
TYPE_VOCAB = 4    # segment / token-type vocab (grapheme / phoneme / special)
MAX_POS = 64
B = 2
T = 16
D = 32            # hidden_size  -> PretrainedModel.out_dim
H = 2             # attention heads
F = 64            # FFN intermediate size
LAYERS = 2
EPS = 1e-12
PHONE_ID = 1
OUT_LANES = 128   # fused lane-dense output slab: [hid | phone | zero pad]


# ----------------------------- fused encoder kernel -----------------------------
def _encoder_kernel(emb_ref, amask_ref, seg_ref, emb_g_ref, emb_b_ref,
                    wq_ref, wk_ref, wv_ref, bq_ref, bk_ref, bv_ref,
                    wo_ref, bo_ref, ln1_g_ref, ln1_b_ref,
                    w1_ref, b1_ref, w2_ref, b2_ref, ln2_g_ref, ln2_b_ref,
                    out_ref, x_scr, *, num_heads, phone_id):
    f32 = jnp.float32
    bf16 = jnp.bfloat16
    Tt, Dd = x_scr.shape
    out_lanes = out_ref.shape[-1]
    hd = Dd // num_heads
    scale = 1.0 / math.sqrt(hd)
    li = pl.program_id(1)

    def ln(v, g, b):                   # f32 LayerNorm over the hidden dim
        mu = jnp.mean(v, axis=-1, keepdims=True)
        var = jnp.mean(jnp.square(v - mu), axis=-1, keepdims=True)
        return (v - mu) * lax.rsqrt(var + EPS) * g + b

    # first layer step of this batch: embedding LayerNorm into the resident scratch
    @pl.when(li == 0)
    def _():
        x_scr[...] = ln(emb_ref[...].astype(f32), emb_g_ref[...], emb_b_ref[...])

    x = x_scr[...]                                            # [T, D] f32, resident

    # additive attention bias built in-kernel from the per-batch key-validity row
    bias = jnp.where(amask_ref[0] > 0, 0.0, -1e9).astype(f32)  # [1, T]

    # per-head lane masks, hoisted out of the head loop
    lane = lax.broadcasted_iota(jnp.int32, (1, Dd), 1)
    head_masks = [(lane >= h * hd) & (lane < (h + 1) * hd) for h in range(num_heads)]

    # ---- self-attention: three lane-aligned projections (no lane-slice relayouts) ----
    xb = x.astype(bf16)
    q = jnp.dot(xb, wq_ref[0], preferred_element_type=f32) + bq_ref[0]
    k = jnp.dot(xb, wk_ref[0], preferred_element_type=f32) + bk_ref[0]
    v = jnp.dot(xb, wv_ref[0], preferred_element_type=f32) + bv_ref[0]

    qb = q.astype(bf16)
    ctx = jnp.zeros((Tt, Dd), f32)
    for hm in head_masks:
        # masking k alone already restricts the contraction to head-h lanes;
        # masking v makes each head's output land in its own lanes (sum == concat)
        kh = jnp.where(hm, k, 0.0).astype(bf16)
        vh = jnp.where(hm, v, 0.0).astype(bf16)
        s = lax.dot_general(qb, kh, (((1,), (1,)), ((), ())),
                            preferred_element_type=f32) * scale     # [T, T]
        s = s + bias
        s = s - jnp.max(s, axis=-1, keepdims=True)
        p = jnp.exp(s)
        p = p * pl.reciprocal(jnp.sum(p, axis=-1, keepdims=True), approx=True)
        ctx = ctx + jnp.dot(p.astype(bf16), vh, preferred_element_type=f32)

    attn = jnp.dot(ctx.astype(bf16), wo_ref[0], preferred_element_type=f32) + bo_ref[0]
    x1 = ln(x + attn, ln1_g_ref[0], ln1_b_ref[0])

    # ---- FFN ----
    h1 = jnp.dot(x1.astype(bf16), w1_ref[0], preferred_element_type=f32) + b1_ref[0]
    h1 = 0.5 * h1 * (1.0 + jnp.tanh(
        0.7978845608028654 * (h1 + 0.044715 * h1 * h1 * h1)))        # GELU (tanh)
    ffn = jnp.dot(h1.astype(bf16), w2_ref[0], preferred_element_type=f32) + b2_ref[0]
    x_new = ln(x1 + ffn, ln2_g_ref[0], ln2_b_ref[0])
    x_scr[...] = x_new

    # ---- last layer: extract_phone_seq + lane-dense fused output store ----
    @pl.when(li == pl.num_programs(1) - 1)
    def _():
        seg = seg_ref[0]                                             # [1, T] int32
        m = seg == phone_id                                          # [1, T]
        i_idx = lax.broadcasted_iota(jnp.int32, (Tt, Tt), 0)
        j_idx = lax.broadcasted_iota(jnp.int32, (Tt, Tt), 1)
        tri = (i_idx <= j_idx).astype(bf16)                          # exact 0/1
        cum = jnp.dot(m.astype(bf16), tri, preferred_element_type=f32)  # counts <= T
        pos = cum.astype(jnp.int32) - 1                              # target row per col
        scatter = (m & (i_idx == pos)).astype(f32)                   # [T, T] 0/1
        phone = jnp.dot(scatter, x_new, preferred_element_type=f32)  # f32 -> exact rows
        # place hid -> lanes [0, D), phone -> [D, 2D) with exact 0/1 placement matmuls
        d_row = lax.broadcasted_iota(jnp.int32, (Dd, out_lanes), 0)
        l_col = lax.broadcasted_iota(jnp.int32, (Dd, out_lanes), 1)
        p_hid = (l_col == d_row).astype(f32)
        p_pho = (l_col == d_row + Dd).astype(f32)
        out_ref[...] = (jnp.dot(x_new, p_hid, preferred_element_type=f32)
                        + jnp.dot(phone, p_pho, preferred_element_type=f32)
                        ).astype(out_ref.dtype)


def fused_encoder(emb_flat, amask, seg, params, *, num_heads, phone_id=PHONE_ID):
    Mrows, Dd = emb_flat.shape
    Bb, _, Tt = amask.shape
    Ll = params["wq"].shape[0]
    Ff = params["w1"].shape[-1]

    kernel = functools.partial(_encoder_kernel, num_heads=num_heads, phone_id=phone_id)

    def layer_spec(tail):
        # per-layer block of a stacked [L, ...] weight; prefetched along the layer axis
        return pl.BlockSpec((1,) + tail, lambda b, l: (l, 0, 0))

    in_specs = [
        pl.BlockSpec((Tt, Dd), lambda b, l: (b, 0)),        # emb (per-batch rows)
        pl.BlockSpec((1, 1, Tt), lambda b, l: (b, 0, 0)),   # attention mask
        pl.BlockSpec((1, 1, Tt), lambda b, l: (b, 0, 0)),   # segment ids
        pl.BlockSpec((1, Dd), lambda b, l: (0, 0)),         # emb LN gamma
        pl.BlockSpec((1, Dd), lambda b, l: (0, 0)),         # emb LN beta
        layer_spec((Dd, Dd)), layer_spec((Dd, Dd)), layer_spec((Dd, Dd)),   # wq wk wv
        layer_spec((1, Dd)), layer_spec((1, Dd)), layer_spec((1, Dd)),      # bq bk bv
        layer_spec((Dd, Dd)), layer_spec((1, Dd)),                          # wo bo
        layer_spec((1, Dd)), layer_spec((1, Dd)),                           # ln1 g/b
        layer_spec((Dd, Ff)), layer_spec((1, Ff)),                          # w1 b1
        layer_spec((Ff, Dd)), layer_spec((1, Dd)),                          # w2 b2
        layer_spec((1, Dd)), layer_spec((1, Dd)),                           # ln2 g/b
    ]

    args = (emb_flat, amask, seg, params["emb_ln_g"], params["emb_ln_b"],
            params["wq"], params["wk"], params["wv"],
            params["bq"], params["bk"], params["bv"],
            params["wo"], params["bo"],
            params["ln1_g"], params["ln1_b"],
            params["w1"], params["b1"], params["w2"], params["b2"],
            params["ln2_g"], params["ln2_b"])

    return pl.pallas_call(
        kernel,
        out_shape=jax.ShapeDtypeStruct((Mrows, OUT_LANES), jnp.float32),
        grid=(Bb, Ll),
        in_specs=in_specs,
        out_specs=pl.BlockSpec((Tt, OUT_LANES), lambda b, l: (b, 0)),
        scratch_shapes=[pltpu.VMEM((Tt, Dd), jnp.float32)],   # resident activations
        compiler_params=pltpu.CompilerParams(
            dimension_semantics=("parallel", "arbitrary")),
    )(*args)


# ----------------------------- parameter init (deterministic) -------------------
def init_params(key):
    def normal(k, shape):
        return (0.02 * jax.random.normal(k, shape)).astype(jnp.float32)

    keys = jax.random.split(key, 3 + LAYERS)
    params = {
        "tok_emb": normal(keys[0], (VOCAB, D)),
        "pos_emb": normal(keys[1], (MAX_POS, D)),
        "seg_emb": normal(keys[2], (TYPE_VOCAB, D)),
        "emb_ln_g": jnp.ones((1, D), jnp.float32),
        "emb_ln_b": jnp.zeros((1, D), jnp.float32),
    }
    wq, wk, wv, wo = [], [], [], []
    bq, bk, bv, bo = [], [], [], []
    ln1g, ln1b, w1s, b1s, w2s, b2s, ln2g, ln2b = [], [], [], [], [], [], [], []
    for li in range(LAYERS):
        lk = jax.random.split(keys[3 + li], 6)
        wq.append(normal(lk[0], (D, D))); wk.append(normal(lk[1], (D, D)))
        wv.append(normal(lk[2], (D, D))); wo.append(normal(lk[3], (D, D)))
        for lst, shp in ((bq, (1, D)), (bk, (1, D)), (bv, (1, D)), (bo, (1, D))):
            lst.append(jnp.zeros(shp, jnp.float32))
        ln1g.append(jnp.ones((1, D), jnp.float32)); ln1b.append(jnp.zeros((1, D), jnp.float32))
        w1s.append(normal(lk[4], (D, F))); b1s.append(jnp.zeros((1, F), jnp.float32))
        w2s.append(normal(lk[5], (F, D))); b2s.append(jnp.zeros((1, D), jnp.float32))
        ln2g.append(jnp.ones((1, D), jnp.float32)); ln2b.append(jnp.zeros((1, D), jnp.float32))

    st = lambda xs, dt: jnp.stack(xs).astype(dt)
    params.update({
        "wq": st(wq, jnp.bfloat16), "wk": st(wk, jnp.bfloat16), "wv": st(wv, jnp.bfloat16),
        "bq": st(bq, jnp.float32), "bk": st(bk, jnp.float32), "bv": st(bv, jnp.float32),
        "wo": st(wo, jnp.bfloat16), "bo": st(bo, jnp.float32),
        "ln1_g": st(ln1g, jnp.float32), "ln1_b": st(ln1b, jnp.float32),
        "w1": st(w1s, jnp.bfloat16), "b1": st(b1s, jnp.float32),
        "w2": st(w2s, jnp.bfloat16), "b2": st(b2s, jnp.float32),
        "ln2_g": st(ln2g, jnp.float32), "ln2_b": st(ln2b, jnp.float32),
    })
    return params


# ----------------------------- forward (jittable, no host sync) -----------------
@jax.jit
def forward(token_ids, segment_ids, attention_mask, params):
    Bb, Tt = token_ids.shape
    # embedding lookup (gather) is XLA glue; hot path runs in the fused Pallas kernel
    emb = (jnp.take(params["tok_emb"], token_ids, axis=0)
           + jnp.take(params["seg_emb"], segment_ids, axis=0)
           + params["pos_emb"][None, :Tt, :])
    emb_flat = emb.reshape(Bb * Tt, D).astype(jnp.float32)
    amask = attention_mask.reshape(Bb, 1, Tt).astype(jnp.int32)
    seg = segment_ids.reshape(Bb, 1, Tt).astype(jnp.int32)

    out = fused_encoder(emb_flat, amask, seg, params, num_heads=H, phone_id=PHONE_ID)
    out = out.reshape(Bb, Tt, OUT_LANES)
    last_hidden_state = out[..., :D]
    # phone_seq uses static Lmax = T (zero-padded); same content as torch lens.max()
    phone_seq = out[..., D:2 * D]
    return last_hidden_state, phone_seq


# ----------------------------- main ----------------------------------------------
if __name__ == "__main__":
    key = jax.random.PRNGKey(0)
    pkey, tkey = jax.random.split(key)
    params = init_params(pkey)

    # synthetic model inputs (stand-in for tokenizer/collate output)
    token_ids = jax.random.randint(tkey, (B, T), 1, VOCAB).astype(jnp.int32)
    # grapheme segment (0) then phoneme segment (1); batch 1 has 2 pad positions
    segment_ids = jnp.array(
        [[0] * 9 + [1] * 7,
         [0] * 6 + [1] * 8 + [0] * 2], dtype=jnp.int32)
    attention_mask = jnp.array(
        [[1] * 16,
         [1] * 14 + [0] * 2], dtype=jnp.int32)
    token_ids = jnp.where(attention_mask == 1, token_ids, 0)

    last_hidden_state, phone_seq = forward(token_ids, segment_ids, attention_mask, params)
    jax.block_until_ready((last_hidden_state, phone_seq))

    assert last_hidden_state.shape == (B, T, D)
    assert phone_seq.shape == (B, T, D)
    print("KERNEL_OK")
</pallas_src>

<mosaic_0001>
module attributes {stable_mosaic.version = 11 : i64} {
  func.func @_encoder_kernel(%arg0: i32, %arg1: i32, %arg2: memref<16x32xf32, #tpu.memory_space<vmem>>, %arg3: memref<1x1x16xi32, #tpu.memory_space<vmem>>, %arg4: memref<1x1x16xi32, #tpu.memory_space<vmem>>, %arg5: memref<1x32xf32, #tpu.memory_space<vmem>>, %arg6: memref<1x32xf32, #tpu.memory_space<vmem>>, %arg7: memref<1x32x32xbf16, #tpu.memory_space<vmem>>, %arg8: memref<1x32x32xbf16, #tpu.memory_space<vmem>>, %arg9: memref<1x32x32xbf16, #tpu.memory_space<vmem>>, %arg10: memref<1x1x32xf32, #tpu.memory_space<vmem>>, %arg11: memref<1x1x32xf32, #tpu.memory_space<vmem>>, %arg12: memref<1x1x32xf32, #tpu.memory_space<vmem>>, %arg13: memref<1x32x32xbf16, #tpu.memory_space<vmem>>, %arg14: memref<1x1x32xf32, #tpu.memory_space<vmem>>, %arg15: memref<1x1x32xf32, #tpu.memory_space<vmem>>, %arg16: memref<1x1x32xf32, #tpu.memory_space<vmem>>, %arg17: memref<1x32x64xbf16, #tpu.memory_space<vmem>>, %arg18: memref<1x1x64xf32, #tpu.memory_space<vmem>>, %arg19: memref<1x64x32xbf16, #tpu.memory_space<vmem>>, %arg20: memref<1x1x32xf32, #tpu.memory_space<vmem>>, %arg21: memref<1x1x32xf32, #tpu.memory_space<vmem>>, %arg22: memref<1x1x32xf32, #tpu.memory_space<vmem>>, %arg23: memref<16x128xf32, #tpu.memory_space<vmem>>, %arg24: memref<16x32xf32, #tpu.memory_space<vmem>>) attributes {dimension_semantics = [#tpu.dimension_semantics<parallel>, #tpu.dimension_semantics<arbitrary>], iteration_bounds = array<i64: 2, 2>, scalar_prefetch = 0 : i64, scratch_operands = 1 : i64, tpu.core_type = #tpu.core_type<tc>, window_params = [{transform_indices = @transform_0, window_bounds = array<i64: 16, 32>}, {transform_indices = @transform_1, window_bounds = array<i64: 1, 1, 16>}, {transform_indices = @transform_2, window_bounds = array<i64: 1, 1, 16>}, {pipeline_mode = #tpu.pipeline_mode<synchronous>, transform_indices = @transform_3, window_bounds = array<i64: 1, 32>}, {pipeline_mode = #tpu.pipeline_mode<synchronous>, transform_indices = @transform_4, window_bounds = array<i64: 1, 32>}, {transform_indices = @transform_5, window_bounds = array<i64: 1, 32, 32>}, {transform_indices = @transform_6, window_bounds = array<i64: 1, 32, 32>}, {transform_indices = @transform_7, window_bounds = array<i64: 1, 32, 32>}, {transform_indices = @transform_8, window_bounds = array<i64: 1, 1, 32>}, {transform_indices = @transform_9, window_bounds = array<i64: 1, 1, 32>}, {transform_indices = @transform_10, window_bounds = array<i64: 1, 1, 32>}, {transform_indices = @transform_11, window_bounds = array<i64: 1, 32, 32>}, {transform_indices = @transform_12, window_bounds = array<i64: 1, 1, 32>}, {transform_indices = @transform_13, window_bounds = array<i64: 1, 1, 32>}, {transform_indices = @transform_14, window_bounds = array<i64: 1, 1, 32>}, {transform_indices = @transform_15, window_bounds = array<i64: 1, 32, 64>}, {transform_indices = @transform_16, window_bounds = array<i64: 1, 1, 64>}, {transform_indices = @transform_17, window_bounds = array<i64: 1, 64, 32>}, {transform_indices = @transform_18, window_bounds = array<i64: 1, 1, 32>}, {transform_indices = @transform_19, window_bounds = array<i64: 1, 1, 32>}, {transform_indices = @transform_20, window_bounds = array<i64: 1, 1, 32>}, {transform_indices = @transform_21, window_bounds = array<i64: 16, 128>}]} {
    %c0_i32 = arith.constant 0 : i32
    %0 = arith.cmpi eq, %arg1, %c0_i32 : i32
    %1 = arith.extui %0 : i1 to i32
    %c0_i32_0 = arith.constant 0 : i32
    %2 = arith.cmpi ne, %1, %c0_i32_0 : i32
    scf.if %2 {
      %c0_95 = arith.constant 0 : index
      %c0_96 = arith.constant 0 : index
      %197 = vector.load %arg2[%c0_95, %c0_96] : memref<16x32xf32, #tpu.memory_space<vmem>>, vector<16x32xf32>
      %c0_97 = arith.constant 0 : index
      %c0_98 = arith.constant 0 : index
      %198 = vector.load %arg5[%c0_97, %c0_98] : memref<1x32xf32, #tpu.memory_space<vmem>>, vector<1x32xf32>
      %c0_99 = arith.constant 0 : index
      %c0_100 = arith.constant 0 : index
      %199 = vector.load %arg6[%c0_99, %c0_100] : memref<1x32xf32, #tpu.memory_space<vmem>>, vector<1x32xf32>
      %cst_101 = arith.constant dense<0.000000e+00> : vector<16xf32>
      %200 = vector.multi_reduction <add>, %197, %cst_101 [1] : vector<16x32xf32> to vector<16xf32>
      %201 = vector.shape_cast %200 : vector<16xf32> to vector<16x1xf32>
      %cst_102 = arith.constant 3.200000e+01 : f32
      %202 = vector.broadcast %cst_102 : f32 to vector<16x1xf32>
      %203 = arith.divf %201, %202 : vector<16x1xf32>
      %204 = vector.broadcast %203 : vector<16x1xf32> to vector<16x32xf32>
      %205 = arith.subf %197, %204 : vector<16x32xf32>
      %206 = arith.mulf %205, %205 : vector<16x32xf32>
      %cst_103 = arith.constant dense<0.000000e+00> : vector<16xf32>
      %207 = vector.multi_reduction <add>, %206, %cst_103 [1] : vector<16x32xf32> to vector<16xf32>
      %208 = vector.shape_cast %207 : vector<16xf32> to vector<16x1xf32>
      %cst_104 = arith.constant 3.200000e+01 : f32
      %209 = vector.broadcast %cst_104 : f32 to vector<16x1xf32>
      %210 = arith.divf %208, %209 : vector<16x1xf32>
      %211 = vector.broadcast %203 : vector<16x1xf32> to vector<16x32xf32>
      %212 = arith.subf %197, %211 : vector<16x32xf32>
      %cst_105 = arith.constant 9.99999996E-13 : f32
      %213 = vector.broadcast %cst_105 : f32 to vector<16x1xf32>
      %214 = arith.addf %210, %213 : vector<16x1xf32>
      %215 = math.rsqrt %214 : vector<16x1xf32>
      %216 = vector.broadcast %215 : vector<16x1xf32> to vector<16x32xf32>
      %217 = arith.mulf %212, %216 : vector<16x32xf32>
      %218 = vector.broadcast %198 : vector<1x32xf32> to vector<16x32xf32>
      %219 = arith.mulf %217, %218 : vector<16x32xf32>
      %220 = vector.broadcast %199 : vector<1x32xf32> to vector<16x32xf32>
      %221 = arith.addf %219, %220 : vector<16x32xf32>
      %c0_106 = arith.constant 0 : index
      %c0_107 = arith.constant 0 : index
      %222 = vector.load %arg24[%c0_106, %c0_107] : memref<16x32xf32, #tpu.memory_space<vmem>>, vector<16x32xf32>
      tpu.vector_store %arg24[%c0_106, %c0_107], %221 {strides = array<i32>} : memref<16x32xf32, #tpu.memory_space<vmem>>, vector<16x32xf32>,
    } else {
    }
    %c0 = arith.constant 0 : index
    %c0_1 = arith.constant 0 : index
    %3 = vector.load %arg24[%c0, %c0_1] : memref<16x32xf32, #tpu.memory_space<vmem>>, vector<16x32xf32>
    %c0_2 = arith.constant 0 : index
    %c0_3 = arith.constant 0 : index
    %c0_4 = arith.constant 0 : index
    %4 = vector.load %arg3[%c0_2, %c0_3, %c0_4] : memref<1x1x16xi32, #tpu.memory_space<vmem>>, vector<1x1x16xi32>
    %5 = vector.shape_cast %4 : vector<1x1x16xi32> to vector<1x16xi32>
    %c0_i32_5 = arith.constant 0 : i32
    %6 = vector.broadcast %c0_i32_5 : i32 to vector<1x16xi32>
    %7 = arith.cmpi sgt, %5, %6 : vector<1x16xi32>
    %cst = arith.constant 0.000000e+00 : f32
    %cst_6 = arith.constant -1.000000e+09 : f32
    %8 = vector.broadcast %cst : f32 to vector<1x16xf32>
    %9 = vector.broadcast %cst_6 : f32 to vector<1x16xf32>
    %10 = arith.select %7, %8, %9 : vector<1x16xi1>, vector<1x16xf32>
    %11 = tpu.iota {dimensions = array<i32: 1>} : vector<1x32xi32>
    %c0_i32_7 = arith.constant 0 : i32
    %12 = vector.broadcast %c0_i32_7 : i32 to vector<1x32xi32>
    %13 = arith.cmpi sge, %11, %12 : vector<1x32xi32>
    %c16_i32 = arith.constant 16 : i32
    %14 = vector.broadcast %c16_i32 : i32 to vector<1x32xi32>
    %15 = arith.cmpi slt, %11, %14 : vector<1x32xi32>
    %16 = arith.andi %13, %15 : vector<1x32xi1>
    %c16_i32_8 = arith.constant 16 : i32
    %17 = vector.broadcast %c16_i32_8 : i32 to vector<1x32xi32>
    %18 = arith.cmpi sge, %11, %17 : vector<1x32xi32>
    %c32_i32 = arith.constant 32 : i32
    %19 = vector.broadcast %c32_i32 : i32 to vector<1x32xi32>
    %20 = arith.cmpi slt, %11, %19 : vector<1x32xi32>
    %21 = arith.andi %18, %20 : vector<1x32xi1>
    %22 = arith.truncf %3 : vector<16x32xf32> to vector<16x32xbf16>
    %c0_9 = arith.constant 0 : index
    %c0_10 = arith.constant 0 : index
    %c0_11 = arith.constant 0 : index
    %23 = vector.load %arg7[%c0_9, %c0_10, %c0_11] : memref<1x32x32xbf16, #tpu.memory_space<vmem>>, vector<1x32x32xbf16>
    %24 = vector.shape_cast %23 : vector<1x32x32xbf16> to vector<32x32xbf16>
    %cst_12 = arith.constant dense<0.000000e+00> : vector<16x32xf32>
    %25 = tpu.matmul %22, %24, %cst_12 {dimension_numbers = #tpu.dot_dimension_numbers<[1], [0], [0], [1], [0, 0, 1, 1], [], []>} : vector<16x32xbf16>, vector<32x32xbf16>, vector<16x32xf32> -> vector<16x32xf32>
    %c0_13 = arith.constant 0 : index
    %c0_14 = arith.constant 0 : index
    %c0_15 = arith.constant 0 : index
    %26 = vector.load %arg10[%c0_13, %c0_14, %c0_15] : memref<1x1x32xf32, #tpu.memory_space<vmem>>, vector<1x1x32xf32>
    %27 = vector.shape_cast %26 : vector<1x1x32xf32> to vector<1x32xf32>
    %28 = vector.broadcast %27 : vector<1x32xf32> to vector<16x32xf32>
    %29 = arith.addf %25, %28 : vector<16x32xf32>
    %c0_16 = arith.constant 0 : index
    %c0_17 = arith.constant 0 : index
    %c0_18 = arith.constant 0 : index
    %30 = vector.load %arg8[%c0_16, %c0_17, %c0_18] : memref<1x32x32xbf16, #tpu.memory_space<vmem>>, vector<1x32x32xbf16>
    %31 = vector.shape_cast %30 : vector<1x32x32xbf16> to vector<32x32xbf16>
    %cst_19 = arith.constant dense<0.000000e+00> : vector<16x32xf32>
    %32 = tpu.matmul %22, %31, %cst_19 {dimension_numbers = #tpu.dot_dimension_numbers<[1], [0], [0], [1], [0, 0, 1, 1], [], []>} : vector<16x32xbf16>, vector<32x32xbf16>, vector<16x32xf32> -> vector<16x32xf32>
    %c0_20 = arith.constant 0 : index
    %c0_21 = arith.constant 0 : index
    %c0_22 = arith.constant 0 : index
    %33 = vector.load %arg11[%c0_20, %c0_21, %c0_22] : memref<1x1x32xf32, #tpu.memory_space<vmem>>, vector<1x1x32xf32>
    %34 = vector.shape_cast %33 : vector<1x1x32xf32> to vector<1x32xf32>
    %35 = vector.broadcast %34 : vector<1x32xf32> to vector<16x32xf32>
    %36 = arith.addf %32, %35 : vector<16x32xf32>
    %c0_23 = arith.constant 0 : index
    %c0_24 = arith.constant 0 : index
    %c0_25 = arith.constant 0 : index
    %37 = vector.load %arg9[%c0_23, %c0_24, %c0_25] : memref<1x32x32xbf16, #tpu.memory_space<vmem>>, vector<1x32x32xbf16>
    %38 = vector.shape_cast %37 : vector<1x32x32xbf16> to vector<32x32xbf16>
    %cst_26 = arith.constant dense<0.000000e+00> : vector<16x32xf32>
    %39 = tpu.matmul %22, %38, %cst_26 {dimension_numbers = #tpu.dot_dimension_numbers<[1], [0], [0], [1], [0, 0, 1, 1], [], []>} : vector<16x32xbf16>, vector<32x32xbf16>, vector<16x32xf32> -> vector<16x32xf32>
    %c0_27 = arith.constant 0 : index
    %c0_28 = arith.constant 0 : index
    %c0_29 = arith.constant 0 : index
    %40 = vector.load %arg12[%c0_27, %c0_28, %c0_29] : memref<1x1x32xf32, #tpu.memory_space<vmem>>, vector<1x1x32xf32>
    %41 = vector.shape_cast %40 : vector<1x1x32xf32> to vector<1x32xf32>
    %42 = vector.broadcast %41 : vector<1x32xf32> to vector<16x32xf32>
    %43 = arith.addf %39, %42 : vector<16x32xf32>
    %44 = arith.truncf %29 : vector<16x32xf32> to vector<16x32xbf16>
    %cst_30 = arith.constant 0.000000e+00 : f32
    %45 = vector.broadcast %cst_30 : f32 to vector<16x32xf32>
    %cst_31 = arith.constant 0.000000e+00 : f32
    %46 = vector.shape_cast %16 : vector<1x32xi1> to vector<1x32xi1>
    %47 = vector.broadcast %46 : vector<1x32xi1> to vector<16x32xi1>
    %48 = vector.broadcast %cst_31 : f32 to vector<16x32xf32>
    %49 = arith.select %47, %36, %48 : vector<16x32xi1>, vector<16x32xf32>
    %50 = arith.truncf %49 : vector<16x32xf32> to vector<16x32xbf16>
    %cst_32 = arith.constant 0.000000e+00 : f32
    %51 = vector.shape_cast %16 : vector<1x32xi1> to vector<1x32xi1>
    %52 = vector.broadcast %51 : vector<1x32xi1> to vector<16x32xi1>
    %53 = vector.broadcast %cst_32 : f32 to vector<16x32xf32>
    %54 = arith.select %52, %43, %53 : vector<16x32xi1>, vector<16x32xf32>
    %55 = arith.truncf %54 : vector<16x32xf32> to vector<16x32xbf16>
    %cst_33 = arith.constant dense<0.000000e+00> : vector<16x16xf32>
    %56 = tpu.matmul %44, %50, %cst_33 {dimension_numbers = #tpu.dot_dimension_numbers<[1], [1], [0], [0], [0, 0, 1, 0], [], []>} : vector<16x32xbf16>, vector<16x32xbf16>, vector<16x16xf32> -> vector<16x16xf32>
    %cst_34 = arith.constant 2.500000e-01 : f32
    %57 = vector.broadcast %cst_34 : f32 to vector<16x16xf32>
    %58 = arith.mulf %56, %57 : vector<16x16xf32>
    %59 = vector.broadcast %10 : vector<1x16xf32> to vector<16x16xf32>
    %60 = arith.addf %58, %59 : vector<16x16xf32>
    %cst_35 = arith.constant dense<0xFF800000> : vector<16xf32>
    %61 = vector.multi_reduction <maximumf>, %60, %cst_35 [1] : vector<16x16xf32> to vector<16xf32>
    %62 = vector.shape_cast %61 : vector<16xf32> to vector<16x1xf32>
    %63 = vector.broadcast %62 : vector<16x1xf32> to vector<16x16xf32>
    %64 = arith.subf %60, %63 : vector<16x16xf32>
    %65 = math.exp %64 : vector<16x16xf32>
    %cst_36 = arith.constant dense<0.000000e+00> : vector<16xf32>
    %66 = vector.multi_reduction <add>, %65, %cst_36 [1] : vector<16x16xf32> to vector<16xf32>
    %67 = vector.shape_cast %66 : vector<16xf32> to vector<16x1xf32>
    %68 = tpu.reciprocal %67 {approx = true} : vector<16x1xf32> -> vector<16x1xf32>
    %69 = vector.broadcast %68 : vector<16x1xf32> to vector<16x16xf32>
    %70 = arith.mulf %65, %69 : vector<16x16xf32>
    %71 = arith.truncf %70 : vector<16x16xf32> to vector<16x16xbf16>
    %cst_37 = arith.constant dense<0.000000e+00> : vector<16x32xf32>
    %72 = tpu.matmul %71, %55, %cst_37 {dimension_numbers = #tpu.dot_dimension_numbers<[1], [0], [0], [1], [0, 0, 1, 1], [], []>} : vector<16x16xbf16>, vector<16x32xbf16>, vector<16x32xf32> -> vector<16x32xf32>
    %73 = arith.addf %45, %72 : vector<16x32xf32>
    %cst_38 = arith.constant 0.000000e+00 : f32
    %74 = vector.shape_cast %21 : vector<1x32xi1> to vector<1x32xi1>
    %75 = vector.broadcast %74 : vector<1x32xi1> to vector<16x32xi1>
    %76 = vector.broadcast %cst_38 : f32 to vector<16x32xf32>
    %77 = arith.select %75, %36, %76 : vector<16x32xi1>, vector<16x32xf32>
    %78 = arith.truncf %77 : vector<16x32xf32> to vector<16x32xbf16>
    %cst_39 = arith.constant 0.000000e+00 : f32
    %79 = vector.shape_cast %21 : vector<1x32xi1> to vector<1x32xi1>
    %80 = vector.broadcast %79 : vector<1x32xi1> to vector<16x32xi1>
    %81 = vector.broadcast %cst_39 : f32 to vector<16x32xf32>
    %82 = arith.select %80, %43, %81 : vector<16x32xi1>, vector<16x32xf32>
    %83 = arith.truncf %82 : vector<16x32xf32> to vector<16x32xbf16>
    %cst_40 = arith.constant dense<0.000000e+00> : vector<16x16xf32>
    %84 = tpu.matmul %44, %78, %cst_40 {dimension_numbers = #tpu.dot_dimension_numbers<[1], [1], [0], [0], [0, 0, 1, 0], [], []>} : vector<16x32xbf16>, vector<16x32xbf16>, vector<16x16xf32> -> vector<16x16xf32>
    %cst_41 = arith.constant 2.500000e-01 : f32
    %85 = vector.broadcast %cst_41 : f32 to vector<16x16xf32>
    %86 = arith.mulf %84, %85 : vector<16x16xf32>
    %87 = vector.broadcast %10 : vector<1x16xf32> to vector<16x16xf32>
    %88 = arith.addf %86, %87 : vector<16x16xf32>
    %cst_42 = arith.constant dense<0xFF800000> : vector<16xf32>
    %89 = vector.multi_reduction <maximumf>, %88, %cst_42 [1] : vector<16x16xf32> to vector<16xf32>
    %90 = vector.shape_cast %89 : vector<16xf32> to vector<16x1xf32>
    %91 = vector.broadcast %90 : vector<16x1xf32> to vector<16x16xf32>
    %92 = arith.subf %88, %91 : vector<16x16xf32>
    %93 = math.exp %92 : vector<16x16xf32>
    %cst_43 = arith.constant dense<0.000000e+00> : vector<16xf32>
    %94 = vector.multi_reduction <add>, %93, %cst_43 [1] : vector<16x16xf32> to vector<16xf32>
    %95 = vector.shape_cast %94 : vector<16xf32> to vector<16x1xf32>
    %96 = tpu.reciprocal %95 {approx = true} : vector<16x1xf32> -> vector<16x1xf32>
    %97 = vector.broadcast %96 : vector<16x1xf32> to vector<16x16xf32>
    %98 = arith.mulf %93, %97 : vector<16x16xf32>
    %99 = arith.truncf %98 : vector<16x16xf32> to vector<16x16xbf16>
    %cst_44 = arith.constant dense<0.000000e+00> : vector<16x32xf32>
    %100 = tpu.matmul %99, %83, %cst_44 {dimension_numbers = #tpu.dot_dimension_numbers<[1], [0], [0], [1], [0, 0, 1, 1], [], []>} : vector<16x16xbf16>, vector<16x32xbf16>, vector<16x32xf32> -> vector<16x32xf32>
    %101 = arith.addf %73, %100 : vector<16x32xf32>
    %102 = arith.truncf %101 : vector<16x32xf32> to vector<16x32xbf16>
    %c0_45 = arith.constant 0 : index
    %c0_46 = arith.constant 0 : index
    %c0_47 = arith.constant 0 : index
    %103 = vector.load %arg13[%c0_45, %c0_46, %c0_47] : memref<1x32x32xbf16, #tpu.memory_space<vmem>>, vector<1x32x32xbf16>
    %104 = vector.shape_cast %103 : vector<1x32x32xbf16> to vector<32x32xbf16>
    %cst_48 = arith.constant dense<0.000000e+00> : vector<16x32xf32>
    %105 = tpu.matmul %102, %104, %cst_48 {dimension_numbers = #tpu.dot_dimension_numbers<[1], [0], [0], [1], [0, 0, 1, 1], [], []>} : vector<16x32xbf16>, vector<32x32xbf16>, vector<16x32xf32> -> vector<16x32xf32>
    %c0_49 = arith.constant 0 : index
    %c0_50 = arith.constant 0 : index
    %c0_51 = arith.constant 0 : index
    %106 = vector.load %arg14[%c0_49, %c0_50, %c0_51] : memref<1x1x32xf32, #tpu.memory_space<vmem>>, vector<1x1x32xf32>
    %107 = vector.shape_cast %106 : vector<1x1x32xf32> to vector<1x32xf32>
    %108 = vector.broadcast %107 : vector<1x32xf32> to vector<16x32xf32>
    %109 = arith.addf %105, %108 : vector<16x32xf32>
    %110 = arith.addf %3, %109 : vector<16x32xf32>
    %c0_52 = arith.constant 0 : index
    %c0_53 = arith.constant 0 : index
    %c0_54 = arith.constant 0 : index
    %111 = vector.load %arg15[%c0_52, %c0_53, %c0_54] : memref<1x1x32xf32, #tpu.memory_space<vmem>>, vector<1x1x32xf32>
    %112 = vector.shape_cast %111 : vector<1x1x32xf32> to vector<1x32xf32>
    %c0_55 = arith.constant 0 : index
    %c0_56 = arith.constant 0 : index
    %c0_57 = arith.constant 0 : index
    %113 = vector.load %arg16[%c0_55, %c0_56, %c0_57] : memref<1x1x32xf32, #tpu.memory_space<vmem>>, vector<1x1x32xf32>
    %114 = vector.shape_cast %113 : vector<1x1x32xf32> to vector<1x32xf32>
    %cst_58 = arith.constant dense<0.000000e+00> : vector<16xf32>
    %115 = vector.multi_reduction <add>, %110, %cst_58 [1] : vector<16x32xf32> to vector<16xf32>
    %116 = vector.shape_cast %115 : vector<16xf32> to vector<16x1xf32>
    %cst_59 = arith.constant 3.200000e+01 : f32
    %117 = vector.broadcast %cst_59 : f32 to vector<16x1xf32>
    %118 = arith.divf %116, %117 : vector<16x1xf32>
    %119 = vector.broadcast %118 : vector<16x1xf32> to vector<16x32xf32>
    %120 = arith.subf %110, %119 : vector<16x32xf32>
    %121 = arith.mulf %120, %120 : vector<16x32xf32>
    %cst_60 = arith.constant dense<0.000000e+00> : vector<16xf32>
    %122 = vector.multi_reduction <add>, %121, %cst_60 [1] : vector<16x32xf32> to vector<16xf32>
    %123 = vector.shape_cast %122 : vector<16xf32> to vector<16x1xf32>
    %cst_61 = arith.constant 3.200000e+01 : f32
    %124 = vector.broadcast %cst_61 : f32 to vector<16x1xf32>
    %125 = arith.divf %123, %124 : vector<16x1xf32>
    %126 = vector.broadcast %118 : vector<16x1xf32> to vector<16x32xf32>
    %127 = arith.subf %110, %126 : vector<16x32xf32>
    %cst_62 = arith.constant 9.99999996E-13 : f32
    %128 = vector.broadcast %cst_62 : f32 to vector<16x1xf32>
    %129 = arith.addf %125, %128 : vector<16x1xf32>
    %130 = math.rsqrt %129 : vector<16x1xf32>
    %131 = vector.broadcast %130 : vector<16x1xf32> to vector<16x32xf32>
    %132 = arith.mulf %127, %131 : vector<16x32xf32>
    %133 = vector.broadcast %112 : vector<1x32xf32> to vector<16x32xf32>
    %134 = arith.mulf %132, %133 : vector<16x32xf32>
    %135 = vector.broadcast %114 : vector<1x32xf32> to vector<16x32xf32>
    %136 = arith.addf %134, %135 : vector<16x32xf32>
    %137 = arith.truncf %136 : vector<16x32xf32> to vector<16x32xbf16>
    %c0_63 = arith.constant 0 : index
    %c0_64 = arith.constant 0 : index
    %c0_65 = arith.constant 0 : index
    %138 = vector.load %arg17[%c0_63, %c0_64, %c0_65] : memref<1x32x64xbf16, #tpu.memory_space<vmem>>, vector<1x32x64xbf16>
    %139 = vector.shape_cast %138 : vector<1x32x64xbf16> to vector<32x64xbf16>
    %cst_66 = arith.constant dense<0.000000e+00> : vector<16x64xf32>
    %140 = tpu.matmul %137, %139, %cst_66 {dimension_numbers = #tpu.dot_dimension_numbers<[1], [0], [0], [1], [0, 0, 1, 1], [], []>} : vector<16x32xbf16>, vector<32x64xbf16>, vector<16x64xf32> -> vector<16x64xf32>
    %c0_67 = arith.constant 0 : index
    %c0_68 = arith.constant 0 : index
    %c0_69 = arith.constant 0 : index
    %141 = vector.load %arg18[%c0_67, %c0_68, %c0_69] : memref<1x1x64xf32, #tpu.memory_space<vmem>>, vector<1x1x64xf32>
    %142 = vector.shape_cast %141 : vector<1x1x64xf32> to vector<1x64xf32>
    %143 = vector.broadcast %142 : vector<1x64xf32> to vector<16x64xf32>
    %144 = arith.addf %140, %143 : vector<16x64xf32>
    %cst_70 = arith.constant 5.000000e-01 : f32
    %145 = vector.broadcast %cst_70 : f32 to vector<16x64xf32>
    %146 = arith.mulf %145, %144 : vector<16x64xf32>
    %cst_71 = arith.constant 4.471500e-02 : f32
    %147 = vector.broadcast %cst_71 : f32 to vector<16x64xf32>
    %148 = arith.mulf %147, %144 : vector<16x64xf32>
    %149 = arith.mulf %148, %144 : vector<16x64xf32>
    %150 = arith.mulf %149, %144 : vector<16x64xf32>
    %151 = arith.addf %144, %150 : vector<16x64xf32>
    %cst_72 = arith.constant 0.797884583 : f32
    %152 = vector.broadcast %cst_72 : f32 to vector<16x64xf32>
    %153 = arith.mulf %152, %151 : vector<16x64xf32>
    %154 = math.tanh %153 : vector<16x64xf32>
    %cst_73 = arith.constant 1.000000e+00 : f32
    %155 = vector.broadcast %cst_73 : f32 to vector<16x64xf32>
    %156 = arith.addf %155, %154 : vector<16x64xf32>
    %157 = arith.mulf %146, %156 : vector<16x64xf32>
    %158 = arith.truncf %157 : vector<16x64xf32> to vector<16x64xbf16>
    %c0_74 = arith.constant 0 : index
    %c0_75 = arith.constant 0 : index
    %c0_76 = arith.constant 0 : index
    %159 = vector.load %arg19[%c0_74, %c0_75, %c0_76] : memref<1x64x32xbf16, #tpu.memory_space<vmem>>, vector<1x64x32xbf16>
    %160 = vector.shape_cast %159 : vector<1x64x32xbf16> to vector<64x32xbf16>
    %cst_77 = arith.constant dense<0.000000e+00> : vector<16x32xf32>
    %161 = tpu.matmul %158, %160, %cst_77 {dimension_numbers = #tpu.dot_dimension_numbers<[1], [0], [0], [1], [0, 0, 1, 1], [], []>} : vector<16x64xbf16>, vector<64x32xbf16>, vector<16x32xf32> -> vector<16x32xf32>
    %c0_78 = arith.constant 0 : index
    %c0_79 = arith.constant 0 : index
    %c0_80 = arith.constant 0 : index
    %162 = vector.load %arg20[%c0_78, %c0_79, %c0_80] : memref<1x1x32xf32, #tpu.memory_space<vmem>>, vector<1x1x32xf32>
    %163 = vector.shape_cast %162 : vector<1x1x32xf32> to vector<1x32xf32>
    %164 = vector.broadcast %163 : vector<1x32xf32> to vector<16x32xf32>
    %165 = arith.addf %161, %164 : vector<16x32xf32>
    %166 = arith.addf %136, %165 : vector<16x32xf32>
    %c0_81 = arith.constant 0 : index
    %c0_82 = arith.constant 0 : index
    %c0_83 = arith.constant 0 : index
    %167 = vector.load %arg21[%c0_81, %c0_82, %c0_83] : memref<1x1x32xf32, #tpu.memory_space<vmem>>, vector<1x1x32xf32>
    %168 = vector.shape_cast %167 : vector<1x1x32xf32> to vector<1x32xf32>
    %c0_84 = arith.constant 0 : index
    %c0_85 = arith.constant 0 : index
    %c0_86 = arith.constant 0 : index
    %169 = vector.load %arg22[%c0_84, %c0_85, %c0_86] : memref<1x1x32xf32, #tpu.memory_space<vmem>>, vector<1x1x32xf32>
    %170 = vector.shape_cast %169 : vector<1x1x32xf32> to vector<1x32xf32>
    %cst_87 = arith.constant dense<0.000000e+00> : vector<16xf32>
    %171 = vector.multi_reduction <add>, %166, %cst_87 [1] : vector<16x32xf32> to vector<16xf32>
    %172 = vector.shape_cast %171 : vector<16xf32> to vector<16x1xf32>
    %cst_88 = arith.constant 3.200000e+01 : f32
    %173 = vector.broadcast %cst_88 : f32 to vector<16x1xf32>
    %174 = arith.divf %172, %173 : vector<16x1xf32>
    %175 = vector.broadcast %174 : vector<16x1xf32> to vector<16x32xf32>
    %176 = arith.subf %166, %175 : vector<16x32xf32>
    %177 = arith.mulf %176, %176 : vector<16x32xf32>
    %cst_89 = arith.constant dense<0.000000e+00> : vector<16xf32>
    %178 = vector.multi_reduction <add>, %177, %cst_89 [1] : vector<16x32xf32> to vector<16xf32>
    %179 = vector.shape_cast %178 : vector<16xf32> to vector<16x1xf32>
    %cst_90 = arith.constant 3.200000e+01 : f32
    %180 = vector.broadcast %cst_90 : f32 to vector<16x1xf32>
    %181 = arith.divf %179, %180 : vector<16x1xf32>
    %182 = vector.broadcast %174 : vector<16x1xf32> to vector<16x32xf32>
    %183 = arith.subf %166, %182 : vector<16x32xf32>
    %cst_91 = arith.constant 9.99999996E-13 : f32
    %184 = vector.broadcast %cst_91 : f32 to vector<16x1xf32>
    %185 = arith.addf %181, %184 : vector<16x1xf32>
    %186 = math.rsqrt %185 : vector<16x1xf32>
    %187 = vector.broadcast %186 : vector<16x1xf32> to vector<16x32xf32>
    %188 = arith.mulf %183, %187 : vector<16x32xf32>
    %189 = vector.broadcast %168 : vector<1x32xf32> to vector<16x32xf32>
    %190 = arith.mulf %188, %189 : vector<16x32xf32>
    %191 = vector.broadcast %170 : vector<1x32xf32> to vector<16x32xf32>
    %192 = arith.addf %190, %191 : vector<16x32xf32>
    %c0_92 = arith.constant 0 : index
    %c0_93 = arith.constant 0 : index
    %193 = vector.load %arg24[%c0_92, %c0_93] : memref<16x32xf32, #tpu.memory_space<vmem>>, vector<16x32xf32>
    tpu.vector_store %arg24[%c0_92, %c0_93], %192 {strides = array<i32>} : memref<16x32xf32, #tpu.memory_space<vmem>>, vector<16x32xf32>,
    %c1_i32 = arith.constant 1 : i32
    %194 = arith.cmpi eq, %arg1, %c1_i32 : i32
    %195 = arith.extui %194 : i1 to i32
    %c0_i32_94 = arith.constant 0 : i32
    %196 = arith.cmpi ne, %195, %c0_i32_94 : i32
    scf.if %196 {
      %c0_95 = arith.constant 0 : index
      %c0_96 = arith.constant 0 : index
      %c0_97 = arith.constant 0 : index
      %197 = vector.load %arg4[%c0_95, %c0_96, %c0_97] : memref<1x1x16xi32, #tpu.memory_space<vmem>>, vector<1x1x16xi32>
      %198 = vector.shape_cast %197 : vector<1x1x16xi32> to vector<1x16xi32>
      %c1_i32_98 = arith.constant 1 : i32
      %199 = vector.broadcast %c1_i32_98 : i32 to vector<1x16xi32>
      %200 = arith.cmpi eq, %198, %199 : vector<1x16xi32>
      %201 = tpu.iota {dimensions = array<i32: 0>} : vector<16x16xi32>
      %202 = tpu.iota {dimensions = array<i32: 1>} : vector<16x16xi32>
      %203 = arith.cmpi sle, %201, %202 : vector<16x16xi32>
      %204 = arith.extui %203 : vector<16x16xi1> to vector<16x16xi32>
      %205 = arith.sitofp %204 : vector<16x16xi32> to vector<16x16xf32>
      %206 = arith.truncf %205 : vector<16x16xf32> to vector<16x16xbf16>
      %207 = arith.extui %200 : vector<1x16xi1> to vector<1x16xi32>
      %208 = arith.sitofp %207 : vector<1x16xi32> to vector<1x16xf32>
      %209 = arith.truncf %208 : vector<1x16xf32> to vector<1x16xbf16>
      %cst_99 = arith.constant dense<0.000000e+00> : vector<1x16xf32>
      %210 = tpu.matmul %209, %206, %cst_99 {dimension_numbers = #tpu.dot_dimension_numbers<[1], [0], [0], [1], [0, 0, 1, 1], [], []>} : vector<1x16xbf16>, vector<16x16xbf16>, vector<1x16xf32> -> vector<1x16xf32>
      %211 = arith.fptosi %210 : vector<1x16xf32> to vector<1x16xi32>
      %c1_i32_100 = arith.constant 1 : i32
      %212 = vector.broadcast %c1_i32_100 : i32 to vector<1x16xi32>
      %213 = arith.subi %211, %212 : vector<1x16xi32>
      %214 = vector.broadcast %213 : vector<1x16xi32> to vector<16x16xi32>
      %215 = arith.cmpi eq, %201, %214 : vector<16x16xi32>
      %216 = vector.broadcast %200 : vector<1x16xi1> to vector<16x16xi1>
      %217 = arith.andi %216, %215 : vector<16x16xi1>
      %218 = arith.extui %217 : vector<16x16xi1> to vector<16x16xi32>
      %219 = arith.sitofp %218 : vector<16x16xi32> to vector<16x16xf32>
      %cst_101 = arith.constant dense<0.000000e+00> : vector<16x32xf32>
      %220 = tpu.matmul %219, %192, %cst_101 {dimension_numbers = #tpu.dot_dimension_numbers<[1], [0], [0], [1], [0, 0, 1, 1], [], []>} : vector<16x16xf32>, vector<16x32xf32>, vector<16x32xf32> -> vector<16x32xf32>
      %221 = tpu.iota {dimensions = array<i32: 0>} : vector<32x128xi32>
      %222 = tpu.iota {dimensions = array<i32: 1>} : vector<32x128xi32>
      %223 = arith.cmpi eq, %222, %221 : vector<32x128xi32>
      %224 = arith.extui %223 : vector<32x128xi1> to vector<32x128xi32>
      %225 = arith.sitofp %224 : vector<32x128xi32> to vector<32x128xf32>
      %c32_i32_102 = arith.constant 32 : i32
      %226 = vector.broadcast %c32_i32_102 : i32 to vector<32x128xi32>
      %227 = arith.addi %221, %226 : vector<32x128xi32>
      %228 = arith.cmpi eq, %222, %227 : vector<32x128xi32>
      %229 = arith.extui %228 : vector<32x128xi1> to vector<32x128xi32>
      %230 = arith.sitofp %229 : vector<32x128xi32> to vector<32x128xf32>
      %cst_103 = arith.constant dense<0.000000e+00> : vector<16x128xf32>
      %231 = tpu.matmul %192, %225, %cst_103 {dimension_numbers = #tpu.dot_dimension_numbers<[1], [0], [0], [1], [0, 0, 1, 1], [], []>} : vector<16x32xf32>, vector<32x128xf32>, vector<16x128xf32> -> vector<16x128xf32>
      %cst_104 = arith.constant dense<0.000000e+00> : vector<16x128xf32>
      %232 = tpu.matmul %220, %230, %cst_104 {dimension_numbers = #tpu.dot_dimension_numbers<[1], [0], [0], [1], [0, 0, 1, 1], [], []>} : vector<16x32xf32>, vector<32x128xf32>, vector<16x128xf32> -> vector<16x128xf32>
      %233 = arith.addf %231, %232 : vector<16x128xf32>
      %c0_105 = arith.constant 0 : index
      %c0_106 = arith.constant 0 : index
      %234 = vector.load %arg23[%c0_105, %c0_106] : memref<16x128xf32, #tpu.memory_space<vmem>>, vector<16x128xf32>
      tpu.vector_store %arg23[%c0_105, %c0_106], %233 {strides = array<i32>} : memref<16x128xf32, #tpu.memory_space<vmem>>, vector<16x128xf32>,
    } else {
    }
    return
  }
  func.func @transform_0(%arg0: i32, %arg1: i32) -> (i32, i32) {
    %c0_i32 = arith.constant 0 : i32
    %c0_i32_0 = arith.constant 0 : i32
    return %arg0, %c0_i32 : i32, i32
  }
  func.func @transform_1(%arg0: i32, %arg1: i32) -> (i32, i32, i32) {
    %c0_i32 = arith.constant 0 : i32
    %c0_i32_0 = arith.constant 0 : i32
    %c0_i32_1 = arith.constant 0 : i32
    return %arg0, %c0_i32, %c0_i32_0 : i32, i32, i32
  }
  func.func @transform_2(%arg0: i32, %arg1: i32) -> (i32, i32, i32) {
    %c0_i32 = arith.constant 0 : i32
    %c0_i32_0 = arith.constant 0 : i32
    %c0_i32_1 = arith.constant 0 : i32
    return %arg0, %c0_i32, %c0_i32_0 : i32, i32, i32
  }
  func.func @transform_3(%arg0: i32, %arg1: i32) -> (i32, i32) {
    %c0_i32 = arith.constant 0 : i32
    %c0_i32_0 = arith.constant 0 : i32
    %c0_i32_1 = arith.constant 0 : i32
    return %c0_i32, %c0_i32_0 : i32, i32
  }
  func.func @transform_4(%arg0: i32, %arg1: i32) -> (i32, i32) {
    %c0_i32 = arith.constant 0 : i32
    %c0_i32_0 = arith.constant 0 : i32
    %c0_i32_1 = arith.constant 0 : i32
    return %c0_i32, %c0_i32_0 : i32, i32
  }
  func.func @transform_5(%arg0: i32, %arg1: i32) -> (i32, i32, i32) {
    %c0_i32 = arith.constant 0 : i32
    %c0_i32_0 = arith.constant 0 : i32
    %c0_i32_1 = arith.constant 0 : i32
    return %arg1, %c0_i32, %c0_i32_0 : i32, i32, i32
  }
  func.func @transform_6(%arg0: i32, %arg1: i32) -> (i32, i32, i32) {
    %c0_i32 = arith.constant 0 : i32
    %c0_i32_0 = arith.constant 0 : i32
    %c0_i32_1 = arith.constant 0 : i32
    return %arg1, %c0_i32, %c0_i32_0 : i32, i32, i32
  }
  func.func @transform_7(%arg0: i32, %arg1: i32) -> (i32, i32, i32) {
    %c0_i32 = arith.constant 0 : i32
    %c0_i32_0 = arith.constant 0 : i32
    %c0_i32_1 = arith.constant 0 : i32
    return %arg1, %c0_i32, %c0_i32_0 : i32, i32, i32
  }
  func.func @transform_8(%arg0: i32, %arg1: i32) -> (i32, i32, i32) {
    %c0_i32 = arith.constant 0 : i32
    %c0_i32_0 = arith.constant 0 : i32
    %c0_i32_1 = arith.constant 0 : i32
    return %arg1, %c0_i32, %c0_i32_0 : i32, i32, i32
  }
  func.func @transform_9(%arg0: i32, %arg1: i32) -> (i32, i32, i32) {
    %c0_i32 = arith.constant 0 : i32
    %c0_i32_0 = arith.constant 0 : i32
    %c0_i32_1 = arith.constant 0 : i32
    return %arg1, %c0_i32, %c0_i32_0 : i32, i32, i32
  }
  func.func @transform_10(%arg0: i32, %arg1: i32) -> (i32, i32, i32) {
    %c0_i32 = arith.constant 0 : i32
    %c0_i32_0 = arith.constant 0 : i32
    %c0_i32_1 = arith.constant 0 : i32
    return %arg1, %c0_i32, %c0_i32_0 : i32, i32, i32
  }
  func.func @transform_11(%arg0: i32, %arg1: i32) -> (i32, i32, i32) {
    %c0_i32 = arith.constant 0 : i32
    %c0_i32_0 = arith.constant 0 : i32
    %c0_i32_1 = arith.constant 0 : i32
    return %arg1, %c0_i32, %c0_i32_0 : i32, i32, i32
  }
  func.func @transform_12(%arg0: i32, %arg1: i32) -> (i32, i32, i32) {
    %c0_i32 = arith.constant 0 : i32
    %c0_i32_0 = arith.constant 0 : i32
    %c0_i32_1 = arith.constant 0 : i32
    return %arg1, %c0_i32, %c0_i32_0 : i32, i32, i32
  }
  func.func @transform_13(%arg0: i32, %arg1: i32) -> (i32, i32, i32) {
    %c0_i32 = arith.constant 0 : i32
    %c0_i32_0 = arith.constant 0 : i32
    %c0_i32_1 = arith.constant 0 : i32
    return %arg1, %c0_i32, %c0_i32_0 : i32, i32, i32
  }
  func.func @transform_14(%arg0: i32, %arg1: i32) -> (i32, i32, i32) {
    %c0_i32 = arith.constant 0 : i32
    %c0_i32_0 = arith.constant 0 : i32
    %c0_i32_1 = arith.constant 0 : i32
    return %arg1, %c0_i32, %c0_i32_0 : i32, i32, i32
  }
  func.func @transform_15(%arg0: i32, %arg1: i32) -> (i32, i32, i32) {
    %c0_i32 = arith.constant 0 : i32
    %c0_i32_0 = arith.constant 0 : i32
    %c0_i32_1 = arith.constant 0 : i32
    return %arg1, %c0_i32, %c0_i32_0 : i32, i32, i32
  }
  func.func @transform_16(%arg0: i32, %arg1: i32) -> (i32, i32, i32) {
    %c0_i32 = arith.constant 0 : i32
    %c0_i32_0 = arith.constant 0 : i32
    %c0_i32_1 = arith.constant 0 : i32
    return %arg1, %c0_i32, %c0_i32_0 : i32, i32, i32
  }
  func.func @transform_17(%arg0: i32, %arg1: i32) -> (i32, i32, i32) {
    %c0_i32 = arith.constant 0 : i32
    %c0_i32_0 = arith.constant 0 : i32
    %c0_i32_1 = arith.constant 0 : i32
    return %arg1, %c0_i32, %c0_i32_0 : i32, i32, i32
  }
  func.func @transform_18(%arg0: i32, %arg1: i32) -> (i32, i32, i32) {
    %c0_i32 = arith.constant 0 : i32
    %c0_i32_0 = arith.constant 0 : i32
    %c0_i32_1 = arith.constant 0 : i32
    return %arg1, %c0_i32, %c0_i32_0 : i32, i32, i32
  }
  func.func @transform_19(%arg0: i32, %arg1: i32) -> (i32, i32, i32) {
    %c0_i32 = arith.constant 0 : i32
    %c0_i32_0 = arith.constant 0 : i32
    %c0_i32_1 = arith.constant 0 : i32
    return %arg1, %c0_i32, %c0_i32_0 : i32, i32, i32
  }
  func.func @transform_20(%arg0: i32, %arg1: i32) -> (i32, i32, i32) {
    %c0_i32 = arith.constant 0 : i32
    %c0_i32_0 = arith.constant 0 : i32
    %c0_i32_1 = arith.constant 0 : i32
    return %arg1, %c0_i32, %c0_i32_0 : i32, i32, i32
  }
  func.func @transform_21(%arg0: i32, %arg1: i32) -> (i32, i32) {
    %c0_i32 = arith.constant 0 : i32
    %c0_i32_0 = arith.constant 0 : i32
    return %arg0, %c0_i32 : i32, i32
  }
}

</mosaic_0001>

<llo_original>
// kernel: forward.1
$region0: #{forward.1}
  #allocation0 [shape = 'u32[]', space=smem, size = 0x4, offset = 0x4, fixed_abs, tag = 'smem constant byte address 0x4 - core index']
  #allocation1 [shape = 'u32[72,128]{1,0:T(1,128)}', space=vmem, size = 0x9000, scoped, tag = 'internal scratch']
  #allocation2 [shape = 'f32[16,32]{1,0:T(8,128)}', space=vmem, size = 0x2000, scoped, tag = 'scratch operand']
  %s0 = inlined_call_operand.vmem [shape: f32[32,32], index: 0, kind: input, shape index: {}]
  %s1 = inlined_call_operand.vmem [shape: s32[2,1,16], index: 1, kind: input, shape index: {}]
  %s2 = inlined_call_operand.vmem [shape: s32[2,1,16], index: 2, kind: input, shape index: {}]
  %s3 = inlined_call_operand.vmem [shape: f32[1,32], index: 3, kind: input, shape index: {}]
  %s4 = inlined_call_operand.vmem [shape: f32[1,32], index: 4, kind: input, shape index: {}]
  %s5 = inlined_call_operand.vmem [shape: bf16[2,32,32], index: 5, kind: input, shape index: {}]
  %s6 = inlined_call_operand.vmem [shape: bf16[2,32,32], index: 6, kind: input, shape index: {}]
  %s7 = inlined_call_operand.vmem [shape: bf16[2,32,32], index: 7, kind: input, shape index: {}]
  %s8 = inlined_call_operand.vmem [shape: f32[2,1,32], index: 8, kind: input, shape index: {}]
  %s9 = inlined_call_operand.vmem [shape: f32[2,1,32], index: 9, kind: input, shape index: {}]
  %s10 = inlined_call_operand.vmem [shape: f32[2,1,32], index: 10, kind: input, shape index: {}]
  %s11 = inlined_call_operand.vmem [shape: bf16[2,32,32], index: 11, kind: input, shape index: {}]
  %s12 = inlined_call_operand.vmem [shape: f32[2,1,32], index: 12, kind: input, shape index: {}]
  %s13 = inlined_call_operand.vmem [shape: f32[2,1,32], index: 13, kind: input, shape index: {}]
  %s14 = inlined_call_operand.vmem [shape: f32[2,1,32], index: 14, kind: input, shape index: {}]
  %s15 = inlined_call_operand.vmem [shape: bf16[2,32,64], index: 15, kind: input, shape index: {}]
  %s16 = inlined_call_operand.vmem [shape: f32[2,1,64], index: 16, kind: input, shape index: {}]
  %s17 = inlined_call_operand.vmem [shape: bf16[2,64,32], index: 17, kind: input, shape index: {}]
  %s18 = inlined_call_operand.vmem [shape: f32[2,1,32], index: 18, kind: input, shape index: {}]
  %s19 = inlined_call_operand.vmem [shape: f32[2,1,32], index: 19, kind: input, shape index: {}]
  %s20 = inlined_call_operand.vmem [shape: f32[2,1,32], index: 20, kind: input, shape index: {}]
  %s21 = inlined_call_operand.vmem [shape: f32[32,128], index: 21, kind: output, shape index: {}]
  %s22 = sld [smem:[#allocation0]]
  $region125: #{forward.1} parent=0
    _
  %s24 = ssub.s32 1, %s22
  %s25 = scalar_select 0, %s24, %s22
  loop: start=0, step=1, limit=6
  $region2: #{forward.1} parent=0 // loop_pre_header
    _
  $region3: #{forward.1} parent=0 // loop_header
    %s27 = sphi 0, %s31
    %p28 = scmp.ge.s32.totalorder %s27, 6
    %s34 = sphi 0, %s46
    %s35 = sphi 0, %s42
    %s36 = sphi 0, %s34
    %s37 = sphi 0, %s35
    %s38 = sphi 0, %s36
    %s39 = sphi 0, %s37
    %s49 = sphi 0, %s51
    %s52 = sphi 0, %s49
    %s53 = sphi 0, %s52
    %s69 = sphi 0, %s53
    %s75 = sphi 0, %s77
    %s78 = sphi 0, %s75
    %s79 = sphi 0, %s78
    %s95 = sphi 0, %s79
    %s101 = sphi 0, %s103
    %s104 = sphi 0, %s101
    %s105 = sphi 0, %s104
    %s121 = sphi 0, %s105
    %s125 = sphi 0, %s125
    %s127 = sphi 0, %s125
    %s128 = sphi 0, %s127
    %s142 = sphi 0, %s128
    %s146 = sphi 0, %s146
    %s148 = sphi 0, %s146
    %s149 = sphi 0, %s148
    %s163 = sphi 0, %s149
    %s169 = sphi 0, %s171
    %s172 = sphi 0, %s169
    %s173 = sphi 0, %s172
    %s189 = sphi 0, %s173
    %s195 = sphi 0, %s197
    %s198 = sphi 0, %s195
    %s199 = sphi 0, %s198
    %s215 = sphi 0, %s199
    %s221 = sphi 0, %s223
    %s224 = sphi 0, %s221
    %s225 = sphi 0, %s224
    %s241 = sphi 0, %s225
    %s247 = sphi 0, %s249
    %s250 = sphi 0, %s247
    %s251 = sphi 0, %s250
    %s267 = sphi 0, %s251
    %s273 = sphi 0, %s275
    %s276 = sphi 0, %s273
    %s277 = sphi 0, %s276
    %s293 = sphi 0, %s277
    %s299 = sphi 0, %s301
    %s302 = sphi 0, %s299
    %s303 = sphi 0, %s302
    %s319 = sphi 0, %s303
    %s325 = sphi 0, %s327
    %s328 = sphi 0, %s325
    %s329 = sphi 0, %s328
    %s345 = sphi 0, %s329
    %s351 = sphi 0, %s353
    %s354 = sphi 0, %s351
    %s355 = sphi 0, %s354
    %s371 = sphi 0, %s355
    %s377 = sphi 0, %s379
    %s380 = sphi 0, %s377
    %s381 = sphi 0, %s380
    %s397 = sphi 0, %s381
    %s403 = sphi 0, %s405
    %s406 = sphi 0, %s403
    %s407 = sphi 0, %s406
    %s423 = sphi 0, %s407
    %s429 = sphi 0, %s431
    %s432 = sphi 0, %s429
    %s433 = sphi 0, %s432
    %s449 = sphi 0, %s433
    %s455 = sphi 0, %s457
    %s458 = sphi 0, %s455
    %s459 = sphi 0, %s458
    %s475 = sphi 0, %s459
    %s481 = sphi 0, %s483
    %s484 = sphi 0, %s481
    %s485 = sphi 0, %s484
    %s501 = sphi 0, %s485
    %s507 = sphi 0, %s509
    %s510 = sphi 0, %s507
    %s511 = sphi 0, %s510
    %s527 = sphi 0, %s511
    %s533 = sphi 0, %s535
    %s536 = sphi 0, %s533
    %s537 = sphi 0, %s536
    %s553 = sphi 0, %s537
    %s559 = sphi 0, %s561
    %s562 = sphi 0, %s559
    %s563 = sphi 0, %s562
    %s579 = sphi 0, %s563
    %s585 = sphi 0, %s587
    %s588 = sphi 0, %s585
    %s589 = sphi 0, %s588
    %s605 = sphi 0, %s589
  $region4: #{forward.1} parent=0 // loop_header_branch
    %30 = sbr.rel (%p28) target = $region8
  $region5: #{forward.1} parent=0 // loop_body
    %s32 = ssub.s32 %s27, 1
    %s33 = ssub.s32 %s27, 2
    %s40 = sadd.s32 1, %s35
    %p41 = scmp.ge.s32.totalorder %s40, 2
    %s42 = scalar_select %p41, 0, %s40
    %s43 = sadd.s32 1, %s34
    %s44 = scalar_select %p41, %s43, %s34
    %p45 = scmp.ge.s32.totalorder %s44, 2
    %s46 = scalar_select %p45, 0, %s44
    %s47 = ssub.s32 %s34, %s46
    %p48 = scmp.eq.s32.totalorder %s47, 0
    %s50 = sadd.s32 %s49, 1
    %s51 = scalar_select %p48, %s49, %s50
    %p54 = pneg %p48
    %p55 = scmp.eq.s32.totalorder %s27, 3
    %p56 = por %p54, %p55
    %p57 = scmp.ne.s32.totalorder %s49, %s52
    %p58 = scmp.eq.s32.totalorder %s27, 0
    %p59 = por %p57, %p58
    %p60 = scmp.ne.s32.totalorder %s49, %s52
    %p61 = scmp.eq.s32.totalorder %s32, 3
    %p62 = por %p60, %p61
    %p63 = scmp.ne.s32.totalorder %s52, %s53
    %p64 = scmp.eq.s32.totalorder %s32, 0
    %p65 = por %p63, %p64
    %p66 = scmp.ne.s32.totalorder %s52, %s53
    %p67 = scmp.eq.s32.totalorder %s33, 3
    %p68 = por %p66, %p67
    %p70 = scmp.ne.s32.totalorder %s53, %s69
    %p71 = scmp.eq.s32.totalorder %s33, 0
    %p72 = por %p70, %p71
    %s73 = ssub.s32 %s34, %s46
    %p74 = scmp.eq.s32.totalorder %s73, 0
    %s76 = sadd.s32 %s75, 1
    %s77 = scalar_select %p74, %s75, %s76
    %p80 = pneg %p74
    %p81 = scmp.eq.s32.totalorder %s27, 3
    %p82 = por %p80, %p81
    %p83 = scmp.ne.s32.totalorder %s75, %s78
    %p84 = scmp.eq.s32.totalorder %s27, 0
    %p85 = por %p83, %p84
    %p86 = scmp.ne.s32.totalorder %s75, %s78
    %p87 = scmp.eq.s32.totalorder %s32, 3
    %p88 = por %p86, %p87
    %p89 = scmp.ne.s32.totalorder %s78, %s79
    %p90 = scmp.eq.s32.totalorder %s32, 0
    %p91 = por %p89, %p90
    %p92 = scmp.ne.s32.totalorder %s78, %s79
    %p93 = scmp.eq.s32.totalorder %s33, 3
    %p94 = por %p92, %p93
    %p96 = scmp.ne.s32.totalorder %s79, %s95
    %p97 = scmp.eq.s32.totalorder %s33, 0
    %p98 = por %p96, %p97
    %s99 = ssub.s32 %s34, %s46
    %p100 = scmp.eq.s32.totalorder %s99, 0
    %s102 = sadd.s32 %s101, 1
    %s103 = scalar_select %p100, %s101, %s102
    %p106 = pneg %p100
    %p107 = scmp.eq.s32.totalorder %s27, 3
    %p108 = por %p106, %p107
    %p109 = scmp.ne.s32.totalorder %s101, %s104
    %p110 = scmp.eq.s32.totalorder %s27, 0
    %p111 = por %p109, %p110
    %p112 = scmp.ne.s32.totalorder %s101, %s104
    %p113 = scmp.eq.s32.totalorder %s32, 3
    %p114 = por %p112, %p113
    %p115 = scmp.ne.s32.totalorder %s104, %s105
    %p116 = scmp.eq.s32.totalorder %s32, 0
    %p117 = por %p115, %p116
    %p118 = scmp.ne.s32.totalorder %s104, %s105
    %p119 = scmp.eq.s32.totalorder %s33, 3
    %p120 = por %p118, %p119
    %p122 = scmp.ne.s32.totalorder %s105, %s121
    %p123 = scmp.eq.s32.totalorder %s33, 0
    %p124 = por %p122, %p123
    %s126 = sadd.s32 %s125, 1
    %p129 = scmp.eq.s32.totalorder %s27, 3
    %p130 = scmp.ne.s32.totalorder %s125, %s127
    %p131 = scmp.eq.s32.totalorder %s27, 0
    %p132 = por %p130, %p131
    %p133 = scmp.ne.s32.totalorder %s125, %s127
    %p134 = scmp.eq.s32.totalorder %s32, 3
    %p135 = por %p133, %p134
    %p136 = scmp.ne.s32.totalorder %s127, %s128
    %p137 = scmp.eq.s32.totalorder %s32, 0
    %p138 = por %p136, %p137
    %p139 = scmp.ne.s32.totalorder %s127, %s128
    %p140 = scmp.eq.s32.totalorder %s33, 3
    %p141 = por %p139, %p140
    %p143 = scmp.ne.s32.totalorder %s128, %s142
    %p144 = scmp.eq.s32.totalorder %s33, 0
    %p145 = por %p143, %p144
    %s147 = sadd.s32 %s146, 1
    %p150 = scmp.eq.s32.totalorder %s27, 3
    %p151 = scmp.ne.s32.totalorder %s146, %s148
    %p152 = scmp.eq.s32.totalorder %s27, 0
    %p153 = por %p151, %p152
    %p154 = scmp.ne.s32.totalorder %s146, %s148
    %p155 = scmp.eq.s32.totalorder %s32, 3
    %p156 = por %p154, %p155
    %p157 = scmp.ne.s32.totalorder %s148, %s149
    %p158 = scmp.eq.s32.totalorder %s32, 0
    %p159 = por %p157, %p158
    %p160 = scmp.ne.s32.totalorder %s148, %s149
    %p161 = scmp.eq.s32.totalorder %s33, 3
    %p162 = por %p160, %p161
    %p164 = scmp.ne.s32.totalorder %s149, %s163
    %p165 = scmp.eq.s32.totalorder %s33, 0
    %p166 = por %p164, %p165
    %s167 = ssub.s32 %s35, %s42
    %p168 = scmp.eq.s32.totalorder %s167, 0
    %s170 = sadd.s32 %s169, 1
    %s171 = scalar_select %p168, %s169, %s170
    %p174 = pneg %p168
    %p175 = scmp.eq.s32.totalorder %s27, 3
    %p176 = por %p174, %p175
    %p177 = scmp.ne.s32.totalorder %s169, %s172
    %p178 = scmp.eq.s32.totalorder %s27, 0
    %p179 = por %p177, %p178
    %p180 = scmp.ne.s32.totalorder %s169, %s172
    %p181 = scmp.eq.s32.totalorder %s32, 3
    %p182 = por %p180, %p181
    %p183 = scmp.ne.s32.totalorder %s172, %s173
    %p184 = scmp.eq.s32.totalorder %s32, 0
    %p185 = por %p183, %p184
    %p186 = scmp.ne.s32.totalorder %s172, %s173
    %p187 = scmp.eq.s32.totalorder %s33, 3
    %p188 = por %p186, %p187
    %p190 = scmp.ne.s32.totalorder %s173, %s189
    %p191 = scmp.eq.s32.totalorder %s33, 0
    %p192 = por %p190, %p191
    %s193 = ssub.s32 %s35, %s42
    %p194 = scmp.eq.s32.totalorder %s193, 0
    %s196 = sadd.s32 %s195, 1
    %s197 = scalar_select %p194, %s195, %s196
    %p200 = pneg %p194
    %p201 = scmp.eq.s32.totalorder %s27, 3
    %p202 = por %p200, %p201
    %p203 = scmp.ne.s32.totalorder %s195, %s198
    %p204 = scmp.eq.s32.totalorder %s27, 0
    %p205 = por %p203, %p204
    %p206 = scmp.ne.s32.totalorder %s195, %s198
    %p207 = scmp.eq.s32.totalorder %s32, 3
    %p208 = por %p206, %p207
    %p209 = scmp.ne.s32.totalorder %s198, %s199
    %p210 = scmp.eq.s32.totalorder %s32, 0
    %p211 = por %p209, %p210
    %p212 = scmp.ne.s32.totalorder %s198, %s199
    %p213 = scmp.eq.s32.totalorder %s33, 3
    %p214 = por %p212, %p213
    %p216 = scmp.ne.s32.totalorder %s199, %s215
    %p217 = scmp.eq.s32.totalorder %s33, 0
    %p218 = por %p216, %p217
    %s219 = ssub.s32 %s35, %s42
    %p220 = scmp.eq.s32.totalorder %s219, 0
    %s222 = sadd.s32 %s221, 1
    %s223 = scalar_select %p220, %s221, %s222
    %p226 = pneg %p220
    %p227 = scmp.eq.s32.totalorder %s27, 3
    %p228 = por %p226, %p227
    %p229 = scmp.ne.s32.totalorder %s221, %s224
    %p230 = scmp.eq.s32.totalorder %s27, 0
    %p231 = por %p229, %p230
    %p232 = scmp.ne.s32.totalorder %s221, %s224
    %p233 = scmp.eq.s32.totalorder %s32, 3
    %p234 = por %p232, %p233
    %p235 = scmp.ne.s32.totalorder %s224, %s225
    %p236 = scmp.eq.s32.totalorder %s32, 0
    %p237 = por %p235, %p236
    %p238 = scmp.ne.s32.totalorder %s224, %s225
    %p239 = scmp.eq.s32.totalorder %s33, 3
    %p240 = por %p238, %p239
    %p242 = scmp.ne.s32.totalorder %s225, %s241
    %p243 = scmp.eq.s32.totalorder %s33, 0
    %p244 = por %p242, %p243
    %s245 = ssub.s32 %s35, %s42
    %p246 = scmp.eq.s32.totalorder %s245, 0
    %s248 = sadd.s32 %s247, 1
    %s249 = scalar_select %p246, %s247, %s248
    %p252 = pneg %p246
    %p253 = scmp.eq.s32.totalorder %s27, 3
    %p254 = por %p252, %p253
    %p255 = scmp.ne.s32.totalorder %s247, %s250
    %p256 = scmp.eq.s32.totalorder %s27, 0
    %p257 = por %p255, %p256
    %p258 = scmp.ne.s32.totalorder %s247, %s250
    %p259 = scmp.eq.s32.totalorder %s32, 3
    %p260 = por %p258, %p259
    %p261 = scmp.ne.s32.totalorder %s250, %s251
    %p262 = scmp.eq.s32.totalorder %s32, 0
    %p263 = por %p261, %p262
    %p264 = scmp.ne.s32.totalorder %s250, %s251
    %p265 = scmp.eq.s32.totalorder %s33, 3
    %p266 = por %p264, %p265
    %p268 = scmp.ne.s32.totalorder %s251, %s267
    %p269 = scmp.eq.s32.totalorder %s33, 0
    %p270 = por %p268, %p269
    %s271 = ssub.s32 %s35, %s42
    %p272 = scmp.eq.s32.totalorder %s271, 0
    %s274 = sadd.s32 %s273, 1
    %s275 = scalar_select %p272, %s273, %s274
    %p278 = pneg %p272
    %p279 = scmp.eq.s32.totalorder %s27, 3
    %p280 = por %p278, %p279
    %p281 = scmp.ne.s32.totalorder %s273, %s276
    %p282 = scmp.eq.s32.totalorder %s27, 0
    %p283 = por %p281, %p282
    %p284 = scmp.ne.s32.totalorder %s273, %s276
    %p285 = scmp.eq.s32.totalorder %s32, 3
    %p286 = por %p284, %p285
    %p287 = scmp.ne.s32.totalorder %s276, %s277
    %p288 = scmp.eq.s32.totalorder %s32, 0
    %p289 = por %p287, %p288
    %p290 = scmp.ne.s32.totalorder %s276, %s277
    %p291 = scmp.eq.s32.totalorder %s33, 3
    %p292 = por %p290, %p291
    %p294 = scmp.ne.s32.totalorder %s277, %s293
    %p295 = scmp.eq.s32.totalorder %s33, 0
    %p296 = por %p294, %p295
    %s297 = ssub.s32 %s35, %s42
    %p298 = scmp.eq.s32.totalorder %s297, 0
    %s300 = sadd.s32 %s299, 1
    %s301 = scalar_select %p298, %s299, %s300
    %p304 = pneg %p298
    %p305 = scmp.eq.s32.totalorder %s27, 3
    %p306 = por %p304, %p305
    %p307 = scmp.ne.s32.totalorder %s299, %s302
    %p308 = scmp.eq.s32.totalorder %s27, 0
    %p309 = por %p307, %p308
    %p310 = scmp.ne.s32.totalorder %s299, %s302
    %p311 = scmp.eq.s32.totalorder %s32, 3
    %p312 = por %p310, %p311
    %p313 = scmp.ne.s32.totalorder %s302, %s303
    %p314 = scmp.eq.s32.totalorder %s32, 0
    %p315 = por %p313, %p314
    %p316 = scmp.ne.s32.totalorder %s302, %s303
    %p317 = scmp.eq.s32.totalorder %s33, 3
    %p318 = por %p316, %p317
    %p320 = scmp.ne.s32.totalorder %s303, %s319
    %p321 = scmp.eq.s32.totalorder %s33, 0
    %p322 = por %p320, %p321
    %s323 = ssub.s32 %s35, %s42
    %p324 = scmp.eq.s32.totalorder %s323, 0
    %s326 = sadd.s32 %s325, 1
    %s327 = scalar_select %p324, %s325, %s326
    %p330 = pneg %p324
    %p331 = scmp.eq.s32.totalorder %s27, 3
    %p332 = por %p330, %p331
    %p333 = scmp.ne.s32.totalorder %s325, %s328
    %p334 = scmp.eq.s32.totalorder %s27, 0
    %p335 = por %p333, %p334
    %p336 = scmp.ne.s32.totalorder %s325, %s328
    %p337 = scmp.eq.s32.totalorder %s32, 3
    %p338 = por %p336, %p337
    %p339 = scmp.ne.s32.totalorder %s328, %s329
    %p340 = scmp.eq.s32.totalorder %s32, 0
    %p341 = por %p339, %p340
    %p342 = scmp.ne.s32.totalorder %s328, %s329
    %p343 = scmp.eq.s32.totalorder %s33, 3
    %p344 = por %p342, %p343
    %p346 = scmp.ne.s32.totalorder %s329, %s345
    %p347 = scmp.eq.s32.totalorder %s33, 0
    %p348 = por %p346, %p347
    %s349 = ssub.s32 %s35, %s42
    %p350 = scmp.eq.s32.totalorder %s349, 0
    %s352 = sadd.s32 %s351, 1
    %s353 = scalar_select %p350, %s351, %s352
    %p356 = pneg %p350
    %p357 = scmp.eq.s32.totalorder %s27, 3
    %p358 = por %p356, %p357
    %p359 = scmp.ne.s32.totalorder %s351, %s354
    %p360 = scmp.eq.s32.totalorder %s27, 0
    %p361 = por %p359, %p360
    %p362 = scmp.ne.s32.totalorder %s351, %s354
    %p363 = scmp.eq.s32.totalorder %s32, 3
    %p364 = por %p362, %p363
    %p365 = scmp.ne.s32.totalorder %s354, %s355
    %p366 = scmp.eq.s32.totalorder %s32, 0
    %p367 = por %p365, %p366
    %p368 = scmp.ne.s32.totalorder %s354, %s355
    %p369 = scmp.eq.s32.totalorder %s33, 3
    %p370 = por %p368, %p369
    %p372 = scmp.ne.s32.totalorder %s355, %s371
    %p373 = scmp.eq.s32.totalorder %s33, 0
    %p374 = por %p372, %p373
    %s375 = ssub.s32 %s35, %s42
    %p376 = scmp.eq.s32.totalorder %s375, 0
    %s378 = sadd.s32 %s377, 1
    %s379 = scalar_select %p376, %s377, %s378
    %p382 = pneg %p376
    %p383 = scmp.eq.s32.totalorder %s27, 3
    %p384 = por %p382, %p383
    %p385 = scmp.ne.s32.totalorder %s377, %s380
    %p386 = scmp.eq.s32.totalorder %s27, 0
    %p387 = por %p385, %p386
    %p388 = scmp.ne.s32.totalorder %s377, %s380
    %p389 = scmp.eq.s32.totalorder %s32, 3
    %p390 = por %p388, %p389
    %p391 = scmp.ne.s32.totalorder %s380, %s381
    %p392 = scmp.eq.s32.totalorder %s32, 0
    %p393 = por %p391, %p392
    %p394 = scmp.ne.s32.totalorder %s380, %s381
    %p395 = scmp.eq.s32.totalorder %s33, 3
    %p396 = por %p394, %p395
    %p398 = scmp.ne.s32.totalorder %s381, %s397
    %p399 = scmp.eq.s32.totalorder %s33, 0
    %p400 = por %p398, %p399
    %s401 = ssub.s32 %s35, %s42
    %p402 = scmp.eq.s32.totalorder %s401, 0
    %s404 = sadd.s32 %s403, 1
    %s405 = scalar_select %p402, %s403, %s404
    %p408 = pneg %p402
    %p409 = scmp.eq.s32.totalorder %s27, 3
    %p410 = por %p408, %p409
    %p411 = scmp.ne.s32.totalorder %s403, %s406
    %p412 = scmp.eq.s32.totalorder %s27, 0
    %p413 = por %p411, %p412
    %p414 = scmp.ne.s32.totalorder %s403, %s406
    %p415 = scmp.eq.s32.totalorder %s32, 3
    %p416 = por %p414, %p415
    %p417 = scmp.ne.s32.totalorder %s406, %s407
    %p418 = scmp.eq.s32.totalorder %s32, 0
    %p419 = por %p417, %p418
    %p420 = scmp.ne.s32.totalorder %s406, %s407
    %p421 = scmp.eq.s32.totalorder %s33, 3
    %p422 = por %p420, %p421
    %p424 = scmp.ne.s32.totalorder %s407, %s423
    %p425 = scmp.eq.s32.totalorder %s33, 0
    %p426 = por %p424, %p425
    %s427 = ssub.s32 %s35, %s42
    %p428 = scmp.eq.s32.totalorder %s427, 0
    %s430 = sadd.s32 %s429, 1
    %s431 = scalar_select %p428, %s429, %s430
    %p434 = pneg %p428
    %p435 = scmp.eq.s32.totalorder %s27, 3
    %p436 = por %p434, %p435
    %p437 = scmp.ne.s32.totalorder %s429, %s432
    %p438 = scmp.eq.s32.totalorder %s27, 0
    %p439 = por %p437, %p438
    %p440 = scmp.ne.s32.totalorder %s429, %s432
    %p441 = scmp.eq.s32.totalorder %s32, 3
    %p442 = por %p440, %p441
    %p443 = scmp.ne.s32.totalorder %s432, %s433
    %p444 = scmp.eq.s32.totalorder %s32, 0
    %p445 = por %p443, %p444
    %p446 = scmp.ne.s32.totalorder %s432, %s433
    %p447 = scmp.eq.s32.totalorder %s33, 3
    %p448 = por %p446, %p447
    %p450 = scmp.ne.s32.totalorder %s433, %s449
    %p451 = scmp.eq.s32.totalorder %s33, 0
    %p452 = por %p450, %p451
    %s453 = ssub.s32 %s35, %s42
    %p454 = scmp.eq.s32.totalorder %s453, 0
    %s456 = sadd.s32 %s455, 1
    %s457 = scalar_select %p454, %s455, %s456
    %p460 = pneg %p454
    %p461 = scmp.eq.s32.totalorder %s27, 3
    %p462 = por %p460, %p461
    %p463 = scmp.ne.s32.totalorder %s455, %s458
    %p464 = scmp.eq.s32.totalorder %s27, 0
    %p465 = por %p463, %p464
    %p466 = scmp.ne.s32.totalorder %s455, %s458
    %p467 = scmp.eq.s32.totalorder %s32, 3
    %p468 = por %p466, %p467
    %p469 = scmp.ne.s32.totalorder %s458, %s459
    %p470 = scmp.eq.s32.totalorder %s32, 0
    %p471 = por %p469, %p470
    %p472 = scmp.ne.s32.totalorder %s458, %s459
    %p473 = scmp.eq.s32.totalorder %s33, 3
    %p474 = por %p472, %p473
    %p476 = scmp.ne.s32.totalorder %s459, %s475
    %p477 = scmp.eq.s32.totalorder %s33, 0
    %p478 = por %p476, %p477
    %s479 = ssub.s32 %s35, %s42
    %p480 = scmp.eq.s32.totalorder %s479, 0
    %s482 = sadd.s32 %s481, 1
    %s483 = scalar_select %p480, %s481, %s482
    %p486 = pneg %p480
    %p487 = scmp.eq.s32.totalorder %s27, 3
    %p488 = por %p486, %p487
    %p489 = scmp.ne.s32.totalorder %s481, %s484
    %p490 = scmp.eq.s32.totalorder %s27, 0
    %p491 = por %p489, %p490
    %p492 = scmp.ne.s32.totalorder %s481, %s484
    %p493 = scmp.eq.s32.totalorder %s32, 3
    %p494 = por %p492, %p493
    %p495 = scmp.ne.s32.totalorder %s484, %s485
    %p496 = scmp.eq.s32.totalorder %s32, 0
    %p497 = por %p495, %p496
    %p498 = scmp.ne.s32.totalorder %s484, %s485
    %p499 = scmp.eq.s32.totalorder %s33, 3
    %p500 = por %p498, %p499
    %p502 = scmp.ne.s32.totalorder %s485, %s501
    %p503 = scmp.eq.s32.totalorder %s33, 0
    %p504 = por %p502, %p503
    %s505 = ssub.s32 %s35, %s42
    %p506 = scmp.eq.s32.totalorder %s505, 0
    %s508 = sadd.s32 %s507, 1
    %s509 = scalar_select %p506, %s507, %s508
    %p512 = pneg %p506
    %p513 = scmp.eq.s32.totalorder %s27, 3
    %p514 = por %p512, %p513
    %p515 = scmp.ne.s32.totalorder %s507, %s510
    %p516 = scmp.eq.s32.totalorder %s27, 0
    %p517 = por %p515, %p516
    %p518 = scmp.ne.s32.totalorder %s507, %s510
    %p519 = scmp.eq.s32.totalorder %s32, 3
    %p520 = por %p518, %p519
    %p521 = scmp.ne.s32.totalorder %s510, %s511
    %p522 = scmp.eq.s32.totalorder %s32, 0
    %p523 = por %p521, %p522
    %p524 = scmp.ne.s32.totalorder %s510, %s511
    %p525 = scmp.eq.s32.totalorder %s33, 3
    %p526 = por %p524, %p525
    %p528 = scmp.ne.s32.totalorder %s511, %s527
    %p529 = scmp.eq.s32.totalorder %s33, 0
    %p530 = por %p528, %p529
    %s531 = ssub.s32 %s35, %s42
    %p532 = scmp.eq.s32.totalorder %s531, 0
    %s534 = sadd.s32 %s533, 1
    %s535 = scalar_select %p532, %s533, %s534
    %p538 = pneg %p532
    %p539 = scmp.eq.s32.totalorder %s27, 3
    %p540 = por %p538, %p539
    %p541 = scmp.ne.s32.totalorder %s533, %s536
    %p542 = scmp.eq.s32.totalorder %s27, 0
    %p543 = por %p541, %p542
    %p544 = scmp.ne.s32.totalorder %s533, %s536
    %p545 = scmp.eq.s32.totalorder %s32, 3
    %p546 = por %p544, %p545
    %p547 = scmp.ne.s32.totalorder %s536, %s537
    %p548 = scmp.eq.s32.totalorder %s32, 0
    %p549 = por %p547, %p548
    %p550 = scmp.ne.s32.totalorder %s536, %s537
    %p551 = scmp.eq.s32.totalorder %s33, 3
    %p552 = por %p550, %p551
    %p554 = scmp.ne.s32.totalorder %s537, %s553
    %p555 = scmp.eq.s32.totalorder %s33, 0
    %p556 = por %p554, %p555
    %s557 = ssub.s32 %s35, %s42
    %p558 = scmp.eq.s32.totalorder %s557, 0
    %s560 = sadd.s32 %s559, 1
    %s561 = scalar_select %p558, %s559, %s560
    %p564 = pneg %p558
    %p565 = scmp.eq.s32.totalorder %s27, 3
    %p566 = por %p564, %p565
    %p567 = scmp.ne.s32.totalorder %s559, %s562
    %p568 = scmp.eq.s32.totalorder %s27, 0
    %p569 = por %p567, %p568
    %p570 = scmp.ne.s32.totalorder %s559, %s562
    %p571 = scmp.eq.s32.totalorder %s32, 3
    %p572 = por %p570, %p571
    %p573 = scmp.ne.s32.totalorder %s562, %s563
    %p574 = scmp.eq.s32.totalorder %s32, 0
    %p575 = por %p573, %p574
    %p576 = scmp.ne.s32.totalorder %s562, %s563
    %p577 = scmp.eq.s32.totalorder %s33, 3
    %p578 = por %p576, %p577
    %p580 = scmp.ne.s32.totalorder %s563, %s579
    %p581 = scmp.eq.s32.totalorder %s33, 0
    %p582 = por %p580, %p581
    %s583 = ssub.s32 %s34, %s46
    %p584 = scmp.eq.s32.totalorder %s583, 0
    %s586 = sadd.s32 %s585, 1
    %s587 = scalar_select %p584, %s585, %s586
    %p590 = pneg %p584
    %p591 = scmp.eq.s32.totalorder %s27, 3
    %p592 = por %p590, %p591
    %p593 = scmp.ne.s32.totalorder %s585, %s588
    %p594 = scmp.eq.s32.totalorder %s27, 0
    %p595 = por %p593, %p594
    %p596 = scmp.ne.s32.totalorder %s585, %s588
    %p597 = scmp.eq.s32.totalorder %s32, 3
    %p598 = por %p596, %p597
    %p599 = scmp.ne.s32.totalorder %s588, %s589
    %p600 = scmp.eq.s32.totalorder %s32, 0
    %p601 = por %p599, %p600
    %p602 = scmp.ne.s32.totalorder %s588, %s589
    %p603 = scmp.eq.s32.totalorder %s33, 3
    %p604 = por %p602, %p603
    %p606 = scmp.ne.s32.totalorder %s589, %s605
    %p607 = scmp.eq.s32.totalorder %s33, 0
    %p608 = por %p606, %p607
    %p609 = scmp.le.s32.totalorder 1, %s27
    %p610 = scmp.lt.s32.totalorder %s27, 5
    %p611 = pnand %p609, %p610
    %p612 = pneg %p611
    // Predicated region
    $region9: #{forward.1} parent=5 // pred_check
      _
    $region10: #{forward.1} parent=5 // pred_check_branch
      %614 = sbr.rel (%p611) target = $region12
    $region11: #{forward.1} parent=5 // pred_region
      %s615 = ssub.s32 %s27, 1
      // Predicated region
      $region13: #{forward.1} parent=11 // pred_check
        %p616 = pneg %p138
      $region14: #{forward.1} parent=11 // pred_check_branch
        %618 = sbr.rel (%p616) target = $region16
      $region15: #{forward.1} parent=11 // pred_region
        _
      $region16: #{forward.1} parent=11 // pred_fallthru
        _
      // Predicated region
      $region17: #{forward.1} parent=11 // pred_check
        %p619 = pneg %p159
      $region18: #{forward.1} parent=11 // pred_check_branch
        %621 = sbr.rel (%p619) target = $region20
      $region19: #{forward.1} parent=11 // pred_region
        _
      $region20: #{forward.1} parent=11 // pred_fallthru
        _
    $region12: #{forward.1} parent=5 // pred_fallthru
      _
    %p622 = scmp.lt.s32.totalorder %s27, 4
    // Predicated region
    $region21: #{forward.1} parent=5 // pred_check
      %p623 = pneg %p622
    $region22: #{forward.1} parent=5 // pred_check_branch
      %625 = sbr.rel (%p623) target = $region24
    $region23: #{forward.1} parent=5 // pred_region
      // Predicated region
      $region25: #{forward.1} parent=23 // pred_check
        %p626 = pneg %p59
      $region26: #{forward.1} parent=23 // pred_check_branch
        %628 = sbr.rel (%p626) target = $region28
      $region27: #{forward.1} parent=23 // pred_region
        %s629 = smul.u32 2, %s34
        %p630 = scmp.lt.s32.totalorder %s629, 3
        %s631 = scalar_select %p630, %s629, 3
        %s632 = smul.addr %s631, 8
        %s633 = scalar_lea.vmem %s0, %s632
        %s634 = smul.u32 2, %s34
      $region28: #{forward.1} parent=23 // pred_fallthru
        _
      // Predicated region
      $region29: #{forward.1} parent=23 // pred_check
        %p635 = pneg %p85
      $region30: #{forward.1} parent=23 // pred_check_branch
        %637 = sbr.rel (%p635) target = $region32
      $region31: #{forward.1} parent=23 // pred_region
        %p638 = scmp.lt.s32.totalorder %s34, 1
        %s639 = scalar_select %p638, %s34, 1
        %s640 = scalar_lea.vmem %s1, %s639
      $region32: #{forward.1} parent=23 // pred_fallthru
        _
      // Predicated region
      $region33: #{forward.1} parent=23 // pred_check
        %p641 = pneg %p111
      $region34: #{forward.1} parent=23 // pred_check_branch
        %643 = sbr.rel (%p641) target = $region36
      $region35: #{forward.1} parent=23 // pred_region
        %p644 = scmp.lt.s32.totalorder %s34, 1
        %s645 = scalar_select %p644, %s34, 1
        %s646 = scalar_lea.vmem %s2, %s645
      $region36: #{forward.1} parent=23 // pred_fallthru
        _
      // Predicated region
      $region37: #{forward.1} parent=23 // pred_check
        %p647 = pneg %p179
      $region38: #{forward.1} parent=23 // pred_check_branch
        %649 = sbr.rel (%p647) target = $region40
      $region39: #{forward.1} parent=23 // pred_region
        %p650 = scmp.lt.s32.totalorder %s35, 1
        %s651 = scalar_select %p650, %s35, 1
        %s652 = smul.addr %s651, 4
        %s653 = smul.addr %s652, 4
        %s654 = scalar_lea.vmem %s5, %s653
      $region40: #{forward.1} parent=23 // pred_fallthru
        _
      // Predicated region
      $region41: #{forward.1} parent=23 // pred_check
        %p655 = pneg %p205
      $region42: #{forward.1} parent=23 // pred_check_branch
        %657 = sbr.rel (%p655) target = $region44
      $region43: #{forward.1} parent=23 // pred_region
        %p658 = scmp.lt.s32.totalorder %s35, 1
        %s659 = scalar_select %p658, %s35, 1
        %s660 = smul.addr %s659, 4
        %s661 = smul.addr %s660, 4
        %s662 = scalar_lea.vmem %s6, %s661
      $region44: #{forward.1} parent=23 // pred_fallthru
        _
      // Predicated region
      $region45: #{forward.1} parent=23 // pred_check
        %p663 = pneg %p231
      $region46: #{forward.1} parent=23 // pred_check_branch
        %665 = sbr.rel (%p663) target = $region48
      $region47: #{forward.1} parent=23 // pred_region
        %p666 = scmp.lt.s32.totalorder %s35, 1
        %s667 = scalar_select %p666, %s35, 1
        %s668 = smul.addr %s667, 4
        %s669 = smul.addr %s668, 4
        %s670 = scalar_lea.vmem %s7, %s669
      $region48: #{forward.1} parent=23 // pred_fallthru
        _
      // Predicated region
      $region49: #{forward.1} parent=23 // pred_check
        %p671 = pneg %p257
      $region50: #{forward.1} parent=23 // pred_check_branch
        %673 = sbr.rel (%p671) target = $region52
      $region51: #{forward.1} parent=23 // pred_region
        %p674 = scmp.lt.s32.totalorder %s35, 1
        %s675 = scalar_select %p674, %s35, 1
        %s676 = scalar_lea.vmem %s8, %s675
      $region52: #{forward.1} parent=23 // pred_fallthru
        _
      // Predicated region
      $region53: #{forward.1} parent=23 // pred_check
        %p677 = pneg %p283
      $region54: #{forward.1} parent=23 // pred_check_branch
        %679 = sbr.rel (%p677) target = $region56
      $region55: #{forward.1} parent=23 // pred_region
        %p680 = scmp.lt.s32.totalorder %s35, 1
        %s681 = scalar_select %p680, %s35, 1
        %s682 = scalar_lea.vmem %s9, %s681
      $region56: #{forward.1} parent=23 // pred_fallthru
        _
      // Predicated region
      $region57: #{forward.1} parent=23 // pred_check
        %p683 = pneg %p309
      $region58: #{forward.1} parent=23 // pred_check_branch
        %685 = sbr.rel (%p683) target = $region60
      $region59: #{forward.1} parent=23 // pred_region
        %p686 = scmp.lt.s32.totalorder %s35, 1
        %s687 = scalar_select %p686, %s35, 1
        %s688 = scalar_lea.vmem %s10, %s687
      $region60: #{forward.1} parent=23 // pred_fallthru
        _
      // Predicated region
      $region61: #{forward.1} parent=23 // pred_check
        %p689 = pneg %p335
      $region62: #{forward.1} parent=23 // pred_check_branch
        %691 = sbr.rel (%p689) target = $region64
      $region63: #{forward.1} parent=23 // pred_region
        %p692 = scmp.lt.s32.totalorder %s35, 1
        %s693 = scalar_select %p692, %s35, 1
        %s694 = smul.addr %s693, 4
        %s695 = smul.addr %s694, 4
        %s696 = scalar_lea.vmem %s11, %s695
      $region64: #{forward.1} parent=23 // pred_fallthru
        _
      // Predicated region
      $region65: #{forward.1} parent=23 // pred_check
        %p697 = pneg %p361
      $region66: #{forward.1} parent=23 // pred_check_branch
        %699 = sbr.rel (%p697) target = $region68
      $region67: #{forward.1} parent=23 // pred_region
        %p700 = scmp.lt.s32.totalorder %s35, 1
        %s701 = scalar_select %p700, %s35, 1
        %s702 = scalar_lea.vmem %s12, %s701
      $region68: #{forward.1} parent=23 // pred_fallthru
        _
      // Predicated region
      $region69: #{forward.1} parent=23 // pred_check
        %p703 = pneg %p387
      $region70: #{forward.1} parent=23 // pred_check_branch
        %705 = sbr.rel (%p703) target = $region72
      $region71: #{forward.1} parent=23 // pred_region
        %p706 = scmp.lt.s32.totalorder %s35, 1
        %s707 = scalar_select %p706, %s35, 1
        %s708 = scalar_lea.vmem %s13, %s707
      $region72: #{forward.1} parent=23 // pred_fallthru
        _
      // Predicated region
      $region73: #{forward.1} parent=23 // pred_check
        %p709 = pneg %p413
      $region74: #{forward.1} parent=23 // pred_check_branch
        %711 = sbr.rel (%p709) target = $region76
      $region75: #{forward.1} parent=23 // pred_region
        %p712 = scmp.lt.s32.totalorder %s35, 1
        %s713 = scalar_select %p712, %s35, 1
        %s714 = scalar_lea.vmem %s14, %s713
      $region76: #{forward.1} parent=23 // pred_fallthru
        _
      // Predicated region
      $region77: #{forward.1} parent=23 // pred_check
        %p715 = pneg %p439
      $region78: #{forward.1} parent=23 // pred_check_branch
        %717 = sbr.rel (%p715) target = $region80
      $region79: #{forward.1} parent=23 // pred_region
        %p718 = scmp.lt.s32.totalorder %s35, 1
        %s719 = scalar_select %p718, %s35, 1
        %s720 = smul.addr %s719, 4
        %s721 = smul.addr %s720, 4
        %s722 = scalar_lea.vmem %s15, %s721
      $region80: #{forward.1} parent=23 // pred_fallthru
        _
      // Predicated region
      $region81: #{forward.1} parent=23 // pred_check
        %p723 = pneg %p465
      $region82: #{forward.1} parent=23 // pred_check_branch
        %725 = sbr.rel (%p723) target = $region84
      $region83: #{forward.1} parent=23 // pred_region
        %p726 = scmp.lt.s32.totalorder %s35, 1
        %s727 = scalar_select %p726, %s35, 1
        %s728 = scalar_lea.vmem %s16, %s727
      $region84: #{forward.1} parent=23 // pred_fallthru
        _
      // Predicated region
      $region85: #{forward.1} parent=23 // pred_check
        %p729 = pneg %p491
      $region86: #{forward.1} parent=23 // pred_check_branch
        %731 = sbr.rel (%p729) target = $region88
      $region87: #{forward.1} parent=23 // pred_region
        %p732 = scmp.lt.s32.totalorder %s35, 1
        %s733 = scalar_select %p732, %s35, 1
        %s734 = smul.addr %s733, 8
        %s735 = smul.addr %s734, 4
        %s736 = scalar_lea.vmem %s17, %s735
      $region88: #{forward.1} parent=23 // pred_fallthru
        _
      // Predicated region
      $region89: #{forward.1} parent=23 // pred_check
        %p737 = pneg %p517
      $region90: #{forward.1} parent=23 // pred_check_branch
        %739 = sbr.rel (%p737) target = $region92
      $region91: #{forward.1} parent=23 // pred_region
        %p740 = scmp.lt.s32.totalorder %s35, 1
        %s741 = scalar_select %p740, %s35, 1
        %s742 = scalar_lea.vmem %s18, %s741
      $region92: #{forward.1} parent=23 // pred_fallthru
        _
      // Predicated region
      $region93: #{forward.1} parent=23 // pred_check
        %p743 = pneg %p543
      $region94: #{forward.1} parent=23 // pred_check_branch
        %745 = sbr.rel (%p743) target = $region96
      $region95: #{forward.1} parent=23 // pred_region
        %p746 = scmp.lt.s32.totalorder %s35, 1
        %s747 = scalar_select %p746, %s35, 1
        %s748 = scalar_lea.vmem %s19, %s747
      $region96: #{forward.1} parent=23 // pred_fallthru
        _
      // Predicated region
      $region97: #{forward.1} parent=23 // pred_check
        %p749 = pneg %p569
      $region98: #{forward.1} parent=23 // pred_check_branch
        %751 = sbr.rel (%p749) target = $region100
      $region99: #{forward.1} parent=23 // pred_region
        %p752 = scmp.lt.s32.totalorder %s35, 1
        %s753 = scalar_select %p752, %s35, 1
        %s754 = scalar_lea.vmem %s20, %s753
      $region100: #{forward.1} parent=23 // pred_fallthru
        _
    $region24: #{forward.1} parent=5 // pred_fallthru
      _
    %p755 = scmp.le.s32.totalorder 1, %s27
    %p756 = scmp.lt.s32.totalorder %s27, 5
    %p757 = pnand %p755, %p756
    %p758 = pneg %p757
    // Predicated region
    $region101: #{forward.1} parent=5 // pred_check
      _
    $region102: #{forward.1} parent=5 // pred_check_branch
      %760 = sbr.rel (%p757) target = $region104
    $region103: #{forward.1} parent=5 // pred_region
      %s761 = ssub.s32 %s27, 1
      %s762 = smul.u32 2, %s36
      %p763 = scmp.lt.s32.totalorder %s762, 3
      %s764 = scalar_select %p763, %s762, 3
      %s765 = smul.addr %s764, 8
      %s766 = scalar_lea.vmem %s0, %s765
      %p767 = pneg %p65
      %p768 = pneg %p62
      %p769 = scmp.lt.s32.totalorder %s36, 1
      %s770 = scalar_select %p769, %s36, 1
      %s771 = scalar_lea.vmem %s1, %s770
      %p772 = pneg %p91
      %p773 = pneg %p88
      %p774 = scmp.lt.s32.totalorder %s36, 1
      %s775 = scalar_select %p774, %s36, 1
      %s776 = scalar_lea.vmem %s2, %s775
      %p777 = pneg %p117
      %p778 = pneg %p114
      %p779 = pneg %p138
      %p780 = pneg %p135
      %p781 = pneg %p159
      %p782 = pneg %p156
      %p783 = scmp.lt.s32.totalorder %s37, 1
      %s784 = scalar_select %p783, %s37, 1
      %s785 = smul.addr %s784, 4
      %s786 = smul.addr %s785, 4
      %s787 = scalar_lea.vmem %s5, %s786
      %p788 = pneg %p185
      %p789 = pneg %p182
      %p790 = scmp.lt.s32.totalorder %s37, 1
      %s791 = scalar_select %p790, %s37, 1
      %s792 = smul.addr %s791, 4
      %s793 = smul.addr %s792, 4
      %s794 = scalar_lea.vmem %s6, %s793
      %p795 = pneg %p211
      %p796 = pneg %p208
      %p797 = scmp.lt.s32.totalorder %s37, 1
      %s798 = scalar_select %p797, %s37, 1
      %s799 = smul.addr %s798, 4
      %s800 = smul.addr %s799, 4
      %s801 = scalar_lea.vmem %s7, %s800
      %p802 = pneg %p237
      %p803 = pneg %p234
      %p804 = scmp.lt.s32.totalorder %s37, 1
      %s805 = scalar_select %p804, %s37, 1
      %s806 = scalar_lea.vmem %s8, %s805
      %p807 = pneg %p263
      %p808 = pneg %p260
      %p809 = scmp.lt.s32.totalorder %s37, 1
      %s810 = scalar_select %p809, %s37, 1
      %s811 = scalar_lea.vmem %s9, %s810
      %p812 = pneg %p289
      %p813 = pneg %p286
      %p814 = scmp.lt.s32.totalorder %s37, 1
      %s815 = scalar_select %p814, %s37, 1
      %s816 = scalar_lea.vmem %s10, %s815
      %p817 = pneg %p315
      %p818 = pneg %p312
      %p819 = scmp.lt.s32.totalorder %s37, 1
      %s820 = scalar_select %p819, %s37, 1
      %s821 = smul.addr %s820, 4
      %s822 = smul.addr %s821, 4
      %s823 = scalar_lea.vmem %s11, %s822
      %p824 = pneg %p341
      %p825 = pneg %p338
      %p826 = scmp.lt.s32.totalorder %s37, 1
      %s827 = scalar_select %p826, %s37, 1
      %s828 = scalar_lea.vmem %s12, %s827
      %p829 = pneg %p367
      %p830 = pneg %p364
      %p831 = scmp.lt.s32.totalorder %s37, 1
      %s832 = scalar_select %p831, %s37, 1
      %s833 = scalar_lea.vmem %s13, %s832
      %p834 = pneg %p393
      %p835 = pneg %p390
      %p836 = scmp.lt.s32.totalorder %s37, 1
      %s837 = scalar_select %p836, %s37, 1
      %s838 = scalar_lea.vmem %s14, %s837
      %p839 = pneg %p419
      %p840 = pneg %p416
      %p841 = scmp.lt.s32.totalorder %s37, 1
      %s842 = scalar_select %p841, %s37, 1
      %s843 = smul.addr %s842, 4
      %s844 = smul.addr %s843, 4
      %s845 = scalar_lea.vmem %s15, %s844
      %p846 = pneg %p445
      %p847 = pneg %p442
      %p848 = scmp.lt.s32.totalorder %s37, 1
      %s849 = scalar_select %p848, %s37, 1
      %s850 = scalar_lea.vmem %s16, %s849
      %p851 = pneg %p471
      %p852 = pneg %p468
      %p853 = scmp.lt.s32.totalorder %s37, 1
      %s854 = scalar_select %p853, %s37, 1
      %s855 = smul.addr %s854, 8
      %s856 = smul.addr %s855, 4
      %s857 = scalar_lea.vmem %s17, %s856
      %p858 = pneg %p497
      %p859 = pneg %p494
      %p860 = scmp.lt.s32.totalorder %s37, 1
      %s861 = scalar_select %p860, %s37, 1
      %s862 = scalar_lea.vmem %s18, %s861
      %p863 = pneg %p523
      %p864 = pneg %p520
      %p865 = scmp.lt.s32.totalorder %s37, 1
      %s866 = scalar_select %p865, %s37, 1
      %s867 = scalar_lea.vmem %s19, %s866
      %p868 = pneg %p549
      %p869 = pneg %p546
      %p870 = scmp.lt.s32.totalorder %s37, 1
      %s871 = scalar_select %p870, %s37, 1
      %s872 = scalar_lea.vmem %s20, %s871
      %p873 = pneg %p575
      %p874 = pneg %p572
      %p875 = pneg %p601
      %p876 = pneg %p598
      %s877 = smul.u32 2, %s36
      %p878 = scmp.lt.s32.totalorder %s877, 3
      %s879 = scalar_select %p878, %s877, 3
      %s880 = smul.addr %s879, 8
      %s881 = scalar_lea.vmem %s21, %s880
      %s882 = smul.u32 2, %s36
      %p883 = scmp.lt.s32.totalorder %s882, 3
      %s884 = scalar_select %p883, %s882, 3
      %s885 = smul.addr %s884, 8
      %s886 = scalar_lea.vmem %s0, %s885
      %s887 = smul.u32 2, %s36
      %p888 = scmp.lt.s32.totalorder %s36, 1
      %s889 = scalar_select %p888, %s36, 1
      %s890 = scalar_lea.vmem %s1, %s889
      %p891 = scmp.lt.s32.totalorder %s36, 1
      %s892 = scalar_select %p891, %s36, 1
      %s893 = scalar_lea.vmem %s2, %s892
      %p894 = scmp.lt.s32.totalorder %s37, 1
      %s895 = scalar_select %p894, %s37, 1
      %s896 = smul.addr %s895, 4
      %s897 = smul.addr %s896, 4
      %s898 = scalar_lea.vmem %s5, %s897
      %p899 = scmp.lt.s32.totalorder %s37, 1
      %s900 = scalar_select %p899, %s37, 1
      %s901 = smul.addr %s900, 4
      %s902 = smul.addr %s901, 4
      %s903 = scalar_lea.vmem %s6, %s902
      %p904 = scmp.lt.s32.totalorder %s37, 1
      %s905 = scalar_select %p904, %s37, 1
      %s906 = smul.addr %s905, 4
      %s907 = smul.addr %s906, 4
      %s908 = scalar_lea.vmem %s7, %s907
      %p909 = scmp.lt.s32.totalorder %s37, 1
      %s910 = scalar_select %p909, %s37, 1
      %s911 = scalar_lea.vmem %s8, %s910
      %p912 = scmp.lt.s32.totalorder %s37, 1
      %s913 = scalar_select %p912, %s37, 1
      %s914 = scalar_lea.vmem %s9, %s913
      %p915 = scmp.lt.s32.totalorder %s37, 1
      %s916 = scalar_select %p915, %s37, 1
      %s917 = scalar_lea.vmem %s10, %s916
      %p918 = scmp.lt.s32.totalorder %s37, 1
      %s919 = scalar_select %p918, %s37, 1
      %s920 = smul.addr %s919, 4
      %s921 = smul.addr %s920, 4
      %s922 = scalar_lea.vmem %s11, %s921
      %p923 = scmp.lt.s32.totalorder %s37, 1
      %s924 = scalar_select %p923, %s37, 1
      %s925 = scalar_lea.vmem %s12, %s924
      %p926 = scmp.lt.s32.totalorder %s37, 1
      %s927 = scalar_select %p926, %s37, 1
      %s928 = scalar_lea.vmem %s13, %s927
      %p929 = scmp.lt.s32.totalorder %s37, 1
      %s930 = scalar_select %p929, %s37, 1
      %s931 = scalar_lea.vmem %s14, %s930
      %p932 = scmp.lt.s32.totalorder %s37, 1
      %s933 = scalar_select %p932, %s37, 1
      %s934 = smul.addr %s933, 4
      %s935 = smul.addr %s934, 4
      %s936 = scalar_lea.vmem %s15, %s935
      %p937 = scmp.lt.s32.totalorder %s37, 1
      %s938 = scalar_select %p937, %s37, 1
      %s939 = scalar_lea.vmem %s16, %s938
      %p940 = scmp.lt.s32.totalorder %s37, 1
      %s941 = scalar_select %p940, %s37, 1
      %s942 = smul.addr %s941, 8
      %s943 = smul.addr %s942, 4
      %s944 = scalar_lea.vmem %s17, %s943
      %p945 = scmp.lt.s32.totalorder %s37, 1
      %s946 = scalar_select %p945, %s37, 1
      %s947 = scalar_lea.vmem %s18, %s946
      %p948 = scmp.lt.s32.totalorder %s37, 1
      %s949 = scalar_select %p948, %s37, 1
      %s950 = scalar_lea.vmem %s19, %s949
      %p951 = scmp.lt.s32.totalorder %s37, 1
      %s952 = scalar_select %p951, %s37, 1
      %s953 = scalar_lea.vmem %s20, %s952
      %s954 = smul.u32 2, %s36
      %p955 = scmp.lt.s32.totalorder %s954, 3
      %s956 = scalar_select %p955, %s954, 3
      %s957 = smul.addr %s956, 8
      %s958 = scalar_lea.vmem %s21, %s957
      %s959 = smul.u32 2, %s36
      %p961 = scmp.eq.s32.totalorder %s37, 0
      // Predicated region
      $region105: #{forward.1} parent=103 // pred_check
        %p962 = pneg %p961
      $region106: #{forward.1} parent=103 // pred_check_branch
        %964 = sbr.rel (%p962) target = $region108
      $region107: #{forward.1} parent=103 // pred_region
        %v965 = vld [vmem:[%s886] sm:$0xff]
        %v966 = vld [vmem:[%s886 + $0x8] sm:$0xff]
        %v967 = vld [vmem:[%s3] sm:$0x1]
        %v968 = vld [vmem:[%s4] sm:$0x1]
        %vm969 = vcmask 261120
        %v970 = vsel %vm969, %v965, 0.0
        %971 = vadd.xlane.f32.xlu0 %v970
        %v972 = vpop.xlane.xlu0 %971
        %v973 = vsel %vm969, %v966, 0.0
        %974 = vadd.xlane.f32.xlu0 %v973
        %v975 = vpop.xlane.xlu0 %974
        %v976 = vrcp.pop 32.0
        %v977 = vmul.f32 32.0, %v976
        %v978 = vsub.f32 1.0, %v977
        %v979 = vmul.f32 %v976, %v978
        %v980 = vadd.f32 %v976, %v979
        %vm981 = vweird.f32 %v976
        %v982 = vsel %vm981, %v976, %v980
        %v983 = vmul.f32 %v972, %v982
        %v984 = vmul.f32 %v975, %v982
        %v985 = vsub.f32 %v965, %v983
        %v986 = vsub.f32 %v966, %v984
        %v987 = vmul.f32 %v985, %v985
        %v988 = vmul.f32 %v986, %v986
        %v989 = vsel %vm969, %v987, 0.0
        %990 = vadd.xlane.f32.xlu0 %v989
        %v991 = vpop.xlane.xlu0 %990
        %v992 = vsel %vm969, %v988, 0.0
        %993 = vadd.xlane.f32.xlu0 %v992
        %v994 = vpop.xlane.xlu0 %993
        %v995 = vmul.f32 %v991, %v982
        %v996 = vmul.f32 %v994, %v982
        %v997 = vadd.f32 %v995, 1e-12
        %v998 = vadd.f32 %v996, 1e-12
        %v999 = vrsqrt.pop %v997
        %v1000 = vmul.f32 %v999, %v997
        %v1001 = vmul.f32 %v1000, %v999
        %v1002 = vmul.f32 0.5, %v1001
        %v1003 = vsub.f32 1.5, %v1002
        %v1004 = vmul.f32 %v999, %v1003
        %vm1005 = vweird.f32 %v997
        %vm1006 = vweird.f32 %v999
        %vm1007 = vmor %vm1005, %vm1006
        %v1008 = vsel %vm1007, %v999, %v1004
        %v1009 = vrsqrt.pop %v998
        %v1010 = vmul.f32 %v1009, %v998
        %v1011 = vmul.f32 %v1010, %v1009
        %v1012 = vmul.f32 0.5, %v1011
        %v1013 = vsub.f32 1.5, %v1012
        %v1014 = vmul.f32 %v1009, %v1013
        %vm1015 = vweird.f32 %v998
        %vm1016 = vweird.f32 %v1009
        %vm1017 = vmor %vm1015, %vm1016
        %v1018 = vsel %vm1017, %v1009, %v1014
        %v1019 = vmul.f32 %v985, %v1008
        %v1020 = vmul.f32 %v986, %v1018
        %v1022 = vperm.slane %v967, 0
        %v1024 = vmul.f32 %v1019, %v1022
        %v1025 = vmul.f32 %v1020, %v1022
        %v1027 = vperm.slane %v968, 0
        %v1029 = vadd.f32 %v1024, %v1027
        %v1030 = vadd.f32 %v1025, %v1027
        %1031 = vst.msk [vmem:[#allocation2] sm:$0xff] %vm969, %v1029
        %1032 = vst.msk [vmem:[#allocation2 + $0x8] sm:$0xff] %vm969, %v1030
      $region108: #{forward.1} parent=103 // pred_fallthru
        _
      %v1033 = vld [vmem:[#allocation2] sm:$0xff]
      %v1034 = vld [vmem:[#allocation2 + $0x8] sm:$0xff]
      %v1035 = vld [vmem:[%s890] sm:$0x1]
      %vm1036 = vcmp.gt.s32.totalorder %v1035, 0
      %v1037 = vsel %vm1036, 0.0, -1e+09
      %v1038 = vlaneseq
      %v1039 = vand.u32 %v1038, 127
      %vm1040 = vcmp.ge.s32.totalorder %v1039, 0
      %vm1041 = vcmp.lt.s32.totalorder %v1039, 16
      %vm1042 = vmand %vm1040, %vm1041
      %vm1043 = vcmp.ge.s32.totalorder %v1039, 16
      %vm1044 = vcmp.lt.s32.totalorder %v1039, 32
      %vm1045 = vmand %vm1043, %vm1044
      %v1046 = vpack.c.bf16 %v1034, %v1033
      %v1047 = vld [vmem:[%s898] sm:$0xf]
      %v1048 = vld [vmem:[%s898 + $0x4] sm:$0xf]
      %v1049 = vld [vmem:[%s898 + $0x8] sm:$0xf]
      %v1050 = vld [vmem:[%s898 + $0xc] sm:$0xf]
      %v1051 = vld [vmem:[%s911] sm:$0x1]
      %v1053 = vperm.slane %v1051, 0
      %v1059 = vunpack.c.l.b16 %v1047
      %v1060 = vunpack.c.l.b16 %v1048
      %v1061 = vunpack.c.l.b16 %v1049
      %v1062 = vunpack.c.l.b16 %v1050
      %v1063 = vpack.c.b16 %v1060, %v1059
      %v1064 = vpack.c.b16 %v1062, %v1061
      %vm1067 = vcmask 261120
      %v1069 = vsel %vm1067, %v1046, 0
      %1071 = vmatpush.bf16.msra.mxu0 0
      %1072 = vmatpush.bf16.msra.mxu0 0
      %1073 = vmatpush.bf16.msra.mxu0 0
      %1074 = vmatpush.bf16.msra.mxu0 0
      %1075 = vmatpush.bf16.msra.mxu0 0
      %1076 = vmatpush.bf16.msra.mxu0 0
      %1077 = vmatpush.bf16.msra.mxu0 %v1064
      %1078 = vmatpush.bf16.msra.mxu0 %v1063
      %1079 = vmatmul.bf16.gmra.mxu0 %v1069
      %v1080 = vpop.f32.mrf.mxu0
      %v1081 = vadd.f32 %v1053, %v1080
      %v1082 = vpop.f32.mrf.mxu0
      %v1083 = vadd.f32 %v1053, %v1082
      %1084 = vdwg.mxu0
      %v1085 = vld [vmem:[%s903] sm:$0xf]
      %v1086 = vld [vmem:[%s903 + $0x4] sm:$0xf]
      %v1087 = vld [vmem:[%s903 + $0x8] sm:$0xf]
      %v1088 = vld [vmem:[%s903 + $0xc] sm:$0xf]
      %v1089 = vld [vmem:[%s914] sm:$0x1]
      %v1091 = vperm.slane %v1089, 0
      %v1097 = vunpack.c.l.b16 %v1085
      %v1098 = vunpack.c.l.b16 %v1086
      %v1099 = vunpack.c.l.b16 %v1087
      %v1100 = vunpack.c.l.b16 %v1088
      %v1101 = vpack.c.b16 %v1098, %v1097
      %v1102 = vpack.c.b16 %v1100, %v1099
      %1105 = vmatpush.bf16.msra.mxu0 0
      %1106 = vmatpush.bf16.msra.mxu0 0
      %1107 = vmatpush.bf16.msra.mxu0 0
      %1108 = vmatpush.bf16.msra.mxu0 0
      %1109 = vmatpush.bf16.msra.mxu0 0
      %1110 = vmatpush.bf16.msra.mxu0 0
      %1111 = vmatpush.bf16.msra.mxu0 %v1102
      %1112 = vmatpush.bf16.msra.mxu0 %v1101
      %1113 = vmatmul.bf16.gmra.mxu0 %v1069
      %v1114 = vpop.f32.mrf.mxu0
      %v1115 = vadd.f32 %v1091, %v1114
      %v1116 = vpop.f32.mrf.mxu0
      %v1117 = vadd.f32 %v1091, %v1116
      %1118 = vdwg.mxu0
      %v1119 = vld [vmem:[%s908] sm:$0xf]
      %v1120 = vld [vmem:[%s908 + $0x4] sm:$0xf]
      %v1121 = vld [vmem:[%s908 + $0x8] sm:$0xf]
      %v1122 = vld [vmem:[%s908 + $0xc] sm:$0xf]
      %v1123 = vld [vmem:[%s917] sm:$0x1]
      %v1125 = vperm.slane %v1123, 0
      %v1131 = vunpack.c.l.b16 %v1119
      %v1132 = vunpack.c.l.b16 %v1120
      %v1133 = vunpack.c.l.b16 %v1121
      %v1134 = vunpack.c.l.b16 %v1122
      %v1135 = vpack.c.b16 %v1132, %v1131
      %v1136 = vpack.c.b16 %v1134, %v1133
      %1139 = vmatpush.bf16.msra.mxu0 0
      %1140 = vmatpush.bf16.msra.mxu0 0
      %1141 = vmatpush.bf16.msra.mxu0 0
      %1142 = vmatpush.bf16.msra.mxu0 0
      %1143 = vmatpush.bf16.msra.mxu0 0
      %1144 = vmatpush.bf16.msra.mxu0 0
      %1145 = vmatpush.bf16.msra.mxu0 %v1136
      %1146 = vmatpush.bf16.msra.mxu0 %v1135
      %1147 = vmatmul.bf16.gmra.mxu0 %v1069
      %v1148 = vpop.f32.mrf.mxu0
      %v1149 = vadd.f32 %v1125, %v1148
      %v1150 = vpop.f32.mrf.mxu0
      %v1151 = vadd.f32 %v1125, %v1150
      %1152 = vdwg.mxu0
      %v1153 = vpack.c.bf16 %v1083, %v1081
      %v1154 = vsel %vm1042, 1, 0
      %vm1155 = vcmp.eq.s32.totalorder %v1154, 1
      %v1156 = vsel %vm1155, %v1115, 0.0
      %v1157 = vsel %vm1155, %v1117, 0.0
      %v1158 = vpack.c.bf16 %v1157, %v1156
      %v1159 = vsel %vm1155, %v1149, 0.0
      %v1160 = vsel %vm1155, %v1151, 0.0
      %v1161 = vpack.c.bf16 %v1160, %v1159
      %v1163 = vsel %vm1067, %v1153, 0
      %v1166 = vsel %vm1067, %v1158, 0
      %1168 = vmatpush.bf16.xpose.msra.mxu0 0
      %1169 = vmatpush.bf16.xpose.msra.mxu0 0
      %1170 = vmatpush.bf16.xpose.msra.mxu0 0
      %1171 = vmatpush.bf16.xpose.msra.mxu0 0
      %1172 = vmatpush.bf16.xpose.msra.mxu0 0
      %1173 = vmatpush.bf16.xpose.msra.mxu0 0
      %1174 = vmatpush.bf16.xpose.msra.mxu0 0
      %1175 = vmatpush.bf16.xpose.msra.mxu0 %v1166
      %1176 = vmatmul.bf16.gmra.mxu0 %v1163
      %v1177 = vpop.f32.mrf.mxu0
      %v1178 = vadd.f32 0.0, %v1177
      %v1179 = vpop.f32.mrf.mxu0
      %v1180 = vadd.f32 0.0, %v1179
      %1181 = vdwg.mxu0
      %v1182 = vmul.f32 %v1178, 0.25
      %v1183 = vmul.f32 %v1180, 0.25
      %v1185 = vperm.slane %v1037, 0
      %v1187 = vadd.f32 %v1182, %v1185
      %v1188 = vadd.f32 %v1183, %v1185
      %vm1189 = vcmask 130048
      %v1190 = vsel %vm1189, %v1187, -inf
      %1191 = vmax.xlane.f32.xlu0 %v1190
      %v1192 = vpop.xlane.xlu0 %1191
      %v1193 = vsel %vm1189, %v1188, -inf
      %1194 = vmax.xlane.f32.xlu0 %v1193
      %v1195 = vpop.xlane.xlu0 %1194
      %v1196 = vsub.f32 %v1187, %v1192
      %v1197 = vsub.f32 %v1188, %v1195
      %v1198 = vmul.f32 %v1196, 1.442695
      %v1199 = vpow.pop %v1198
      %v1200 = vmul.f32 %v1197, 1.442695
      %v1201 = vpow.pop %v1200
      %v1202 = vsel %vm1189, %v1199, 0.0
      %1203 = vadd.xlane.f32.xlu0 %v1202
      %v1204 = vpop.xlane.xlu0 %1203
      %v1205 = vsel %vm1189, %v1201, 0.0
      %1206 = vadd.xlane.f32.xlu0 %v1205
      %v1207 = vpop.xlane.xlu0 %1206
      %v1208 = vrcp.pop %v1204
      %v1209 = vrcp.pop %v1207
      %v1210 = vmul.f32 %v1199, %v1208
      %v1211 = vmul.f32 %v1201, %v1209
      %v1212 = vpack.c.bf16 %v1211, %v1210
      %v1213 = vsel %vm1045, 1, 0
      %vm1214 = vcmp.eq.s32.totalorder %v1213, 1
      %v1215 = vsel %vm1214, %v1115, 0.0
      %v1216 = vsel %vm1214, %v1117, 0.0
      %v1217 = vpack.c.bf16 %v1216, %v1215
      %v1218 = vsel %vm1214, %v1149, 0.0
      %v1219 = vsel %vm1214, %v1151, 0.0
      %v1220 = vpack.c.bf16 %v1219, %v1218
      %v1222 = vsel %vm1067, %v1217, 0
      %1224 = vmatpush.bf16.xpose.msra.mxu0 0
      %1225 = vmatpush.bf16.xpose.msra.mxu0 0
      %1226 = vmatpush.bf16.xpose.msra.mxu0 0
      %1227 = vmatpush.bf16.xpose.msra.mxu0 0
      %1228 = vmatpush.bf16.xpose.msra.mxu0 0
      %1229 = vmatpush.bf16.xpose.msra.mxu0 0
      %1230 = vmatpush.bf16.xpose.msra.mxu0 0
      %1231 = vmatpush.bf16.xpose.msra.mxu0 %v1222
      %1232 = vmatmul.bf16.gmra.mxu0 %v1163
      %v1233 = vpop.f32.mrf.mxu0
      %v1234 = vadd.f32 0.0, %v1233
      %v1235 = vpop.f32.mrf.mxu0
      %v1236 = vadd.f32 0.0, %v1235
      %1237 = vdwg.mxu0
      %v1238 = vmul.f32 %v1234, 0.25
      %v1239 = vmul.f32 %v1236, 0.25
      %v1240 = vadd.f32 %v1238, %v1185
      %v1241 = vadd.f32 %v1239, %v1185
      %v1242 = vsel %vm1189, %v1240, -inf
      %1243 = vmax.xlane.f32.xlu0 %v1242
      %v1244 = vpop.xlane.xlu0 %1243
      %v1245 = vsel %vm1189, %v1241, -inf
      %1246 = vmax.xlane.f32.xlu0 %v1245
      %v1247 = vpop.xlane.xlu0 %1246
      %v1248 = vsub.f32 %v1240, %v1244
      %v1249 = vsub.f32 %v1241, %v1247
      %v1250 = vmul.f32 %v1248, 1.442695
      %v1251 = vpow.pop %v1250
      %v1252 = vmul.f32 %v1249, 1.442695
      %v1253 = vpow.pop %v1252
      %v1254 = vsel %vm1189, %v1251, 0.0
      %1255 = vadd.xlane.f32.xlu0 %v1254
      %v1256 = vpop.xlane.xlu0 %1255
      %v1257 = vsel %vm1189, %v1253, 0.0
      %1258 = vadd.xlane.f32.xlu0 %v1257
      %v1259 = vpop.xlane.xlu0 %1258
      %v1260 = vrcp.pop %v1256
      %v1261 = vrcp.pop %v1259
      %v1262 = vmul.f32 %v1251, %v1260
      %v1263 = vmul.f32 %v1253, %v1261
      %v1264 = vpack.c.bf16 %v1263, %v1262
      %v1266 = vsel %vm1189, %v1264, 0
      %1268 = vmatpush.bf16.msra.mxu0 0
      %1269 = vmatpush.bf16.msra.mxu0 0
      %1270 = vmatpush.bf16.msra.mxu0 0
      %1271 = vmatpush.bf16.msra.mxu0 0
      %1272 = vmatpush.bf16.msra.mxu0 0
      %1273 = vmatpush.bf16.msra.mxu0 0
      %1274 = vmatpush.bf16.msra.mxu0 0
      %1275 = vmatpush.bf16.msra.mxu0 %v1220
      %1276 = vmatmul.bf16.gmra.mxu0 %v1266
      %v1277 = vpop.f32.mrf.mxu0
      %v1278 = vadd.f32 0.0, %v1277
      %v1279 = vpop.f32.mrf.mxu0
      %v1280 = vadd.f32 0.0, %v1279
      %1281 = vdwg.mxu0
      %v1283 = vsel %vm1189, %v1212, 0
      %1285 = vmatpush.bf16.msra.mxu0 0
      %1286 = vmatpush.bf16.msra.mxu0 0
      %1287 = vmatpush.bf16.msra.mxu0 0
      %1288 = vmatpush.bf16.msra.mxu0 0
      %1289 = vmatpush.bf16.msra.mxu0 0
      %1290 = vmatpush.bf16.msra.mxu0 0
      %1291 = vmatpush.bf16.msra.mxu0 0
      %1292 = vmatpush.bf16.msra.mxu0 %v1161
      %1293 = vmatmul.bf16.gmra.mxu0 %v1283
      %v1294 = vpop.f32.mrf.mxu0
      %v1295 = vadd.f32 %v1278, %v1294
      %v1296 = vpop.f32.mrf.mxu0
      %v1297 = vadd.f32 %v1280, %v1296
      %1298 = vdwg.mxu0
      %v1299 = vpack.c.bf16 %v1297, %v1295
      %v1300 = vld [vmem:[%s922] sm:$0xf]
      %v1301 = vld [vmem:[%s922 + $0x4] sm:$0xf]
      %v1302 = vld [vmem:[%s922 + $0x8] sm:$0xf]
      %v1303 = vld [vmem:[%s922 + $0xc] sm:$0xf]
      %v1304 = vld [vmem:[%s925] sm:$0x1]
      %v1306 = vperm.slane %v1304, 0
      %v1312 = vunpack.c.l.b16 %v1300
      %v1313 = vunpack.c.l.b16 %v1301
      %v1314 = vunpack.c.l.b16 %v1302
      %v1315 = vunpack.c.l.b16 %v1303
      %v1316 = vpack.c.b16 %v1313, %v1312
      %v1317 = vpack.c.b16 %v1315, %v1314
      %v1321 = vsel %vm1067, %v1299, 0
      %1323 = vmatpush.bf16.msra.mxu0 0
      %1324 = vmatpush.bf16.msra.mxu0 0
      %1325 = vmatpush.bf16.msra.mxu0 0
      %1326 = vmatpush.bf16.msra.mxu0 0
      %1327 = vmatpush.bf16.msra.mxu0 0
      %1328 = vmatpush.bf16.msra.mxu0 0
      %1329 = vmatpush.bf16.msra.mxu0 %v1317
      %1330 = vmatpush.bf16.msra.mxu0 %v1316
      %1331 = vmatmul.bf16.gmra.mxu0 %v1321
      %v1332 = vpop.f32.mrf.mxu0
      %v1333 = vadd.f32 %v1306, %v1332
      %v1334 = vpop.f32.mrf.mxu0
      %v1335 = vadd.f32 %v1306, %v1334
      %1336 = vdwg.mxu0
      %v1337 = vadd.f32 %v1033, %v1333
      %v1338 = vadd.f32 %v1034, %v1335
      %v1339 = vld [vmem:[%s928] sm:$0x1]
      %v1340 = vld [vmem:[%s931] sm:$0x1]
      %v1341 = vsel %vm1067, %v1337, 0.0
      %1342 = vadd.xlane.f32.xlu0 %v1341
      %v1343 = vpop.xlane.xlu0 %1342
      %v1344 = vsel %vm1067, %v1338, 0.0
      %1345 = vadd.xlane.f32.xlu0 %v1344
      %v1346 = vpop.xlane.xlu0 %1345
      %v1347 = vrcp.pop 32.0
      %v1348 = vmul.f32 32.0, %v1347
      %v1349 = vsub.f32 1.0, %v1348
      %v1350 = vmul.f32 %v1347, %v1349
      %v1351 = vadd.f32 %v1347, %v1350
      %vm1352 = vweird.f32 %v1347
      %v1353 = vsel %vm1352, %v1347, %v1351
      %v1354 = vmul.f32 %v1343, %v1353
      %v1355 = vmul.f32 %v1346, %v1353
      %v1356 = vsub.f32 %v1337, %v1354
      %v1357 = vsub.f32 %v1338, %v1355
      %v1358 = vmul.f32 %v1356, %v1356
      %v1359 = vmul.f32 %v1357, %v1357
      %v1360 = vsel %vm1067, %v1358, 0.0
      %1361 = vadd.xlane.f32.xlu0 %v1360
      %v1362 = vpop.xlane.xlu0 %1361
      %v1363 = vsel %vm1067, %v1359, 0.0
      %1364 = vadd.xlane.f32.xlu0 %v1363
      %v1365 = vpop.xlane.xlu0 %1364
      %v1366 = vmul.f32 %v1362, %v1353
      %v1367 = vmul.f32 %v1365, %v1353
      %v1368 = vadd.f32 %v1366, 1e-12
      %v1369 = vadd.f32 %v1367, 1e-12
      %v1370 = vrsqrt.pop %v1368
      %v1371 = vmul.f32 %v1370, %v1368
      %v1372 = vmul.f32 %v1371, %v1370
      %v1373 = vmul.f32 0.5, %v1372
      %v1374 = vsub.f32 1.5, %v1373
      %v1375 = vmul.f32 %v1370, %v1374
      %vm1376 = vweird.f32 %v1368
      %vm1377 = vweird.f32 %v1370
      %vm1378 = vmor %vm1376, %vm1377
      %v1379 = vsel %vm1378, %v1370, %v1375
      %v1380 = vrsqrt.pop %v1369
      %v1381 = vmul.f32 %v1380, %v1369
      %v1382 = vmul.f32 %v1381, %v1380
      %v1383 = vmul.f32 0.5, %v1382
      %v1384 = vsub.f32 1.5, %v1383
      %v1385 = vmul.f32 %v1380, %v1384
      %vm1386 = vweird.f32 %v1369
      %vm1387 = vweird.f32 %v1380
      %vm1388 = vmor %vm1386, %vm1387
      %v1389 = vsel %vm1388, %v1380, %v1385
      %v1390 = vmul.f32 %v1356, %v1379
      %v1391 = vmul.f32 %v1357, %v1389
      %v1393 = vperm.slane %v1339, 0
      %v1395 = vmul.f32 %v1390, %v1393
      %v1396 = vmul.f32 %v1391, %v1393
      %v1398 = vperm.slane %v1340, 0
      %v1400 = vadd.f32 %v1395, %v1398
      %v1401 = vadd.f32 %v1396, %v1398
      %v1402 = vpack.c.bf16 %v1401, %v1400
      %v1403 = vld [vmem:[%s936] sm:$0xf]
      %v1404 = vld [vmem:[%s936 + $0x4] sm:$0xf]
      %v1405 = vld [vmem:[%s936 + $0x8] sm:$0xf]
      %v1406 = vld [vmem:[%s936 + $0xc] sm:$0xf]
      %v1407 = vld [vmem:[%s939] sm:$0x1]
      %v1409 = vperm.slane %v1407, 0
      %v1415 = vunpack.c.l.b16 %v1403
      %v1416 = vunpack.c.l.b16 %v1404
      %v1417 = vunpack.c.l.b16 %v1405
      %v1418 = vunpack.c.l.b16 %v1406
      %v1419 = vpack.c.b16 %v1416, %v1415
      %v1420 = vpack.c.b16 %v1418, %v1417
      %v1424 = vsel %vm1067, %v1402, 0
      %1426 = vmatpush.bf16.msra.mxu0 0
      %1427 = vmatpush.bf16.msra.mxu0 0
      %1428 = vmatpush.bf16.msra.mxu0 0
      %1429 = vmatpush.bf16.msra.mxu0 0
      %1430 = vmatpush.bf16.msra.mxu0 0
      %1431 = vmatpush.bf16.msra.mxu0 0
      %1432 = vmatpush.bf16.msra.mxu0 %v1420
      %1433 = vmatpush.bf16.msra.mxu0 %v1419
      %1434 = vmatmul.bf16.gmra.mxu0 %v1424
      %v1435 = vpop.f32.mrf.mxu0
      %v1436 = vadd.f32 %v1409, %v1435
      %v1437 = vpop.f32.mrf.mxu0
      %v1438 = vadd.f32 %v1409, %v1437
      %1439 = vdwg.mxu0
      %v1440 = vmul.f32 %v1436, 0.5
      %v1441 = vmul.f32 %v1438, 0.5
      %v1442 = vmul.f32 %v1436, 0.044715
      %v1443 = vmul.f32 %v1438, 0.044715
      %v1444 = vmul.f32 %v1442, %v1436
      %v1445 = vmul.f32 %v1443, %v1438
      %v1446 = vmul.f32 %v1444, %v1436
      %v1447 = vmul.f32 %v1445, %v1438
      %v1448 = vadd.f32 %v1436, %v1446
      %v1449 = vadd.f32 %v1438, %v1447
      %v1450 = vmul.f32 %v1448, 0.7978846
      %v1451 = vmul.f32 %v1449, 0.7978846
      %v1452 = vtanh.pop %v1450
      %v1453 = vtanh.pop %v1451
      %v1454 = vadd.f32 %v1452, 1.0
      %v1455 = vadd.f32 %v1453, 1.0
      %v1456 = vmul.f32 %v1440, %v1454
      %v1457 = vmul.f32 %v1441, %v1455
      %v1458 = vpack.c.bf16 %v1457, %v1456
      %v1459 = vld [vmem:[%s944] sm:$0xf]
      %v1460 = vld [vmem:[%s944 + $0x4] sm:$0xf]
      %v1461 = vld [vmem:[%s944 + $0x8] sm:$0xf]
      %v1462 = vld [vmem:[%s944 + $0xc] sm:$0xf]
      %v1463 = vld [vmem:[%s944 + $0x10] sm:$0xf]
      %v1464 = vld [vmem:[%s944 + $0x14] sm:$0xf]
      %v1465 = vld [vmem:[%s944 + $0x18] sm:$0xf]
      %v1466 = vld [vmem:[%s944 + $0x1c] sm:$0xf]
      %v1467 = vld [vmem:[%s947] sm:$0x1]
      %v1469 = vperm.slane %v1467, 0
      %v1479 = vunpack.c.l.b16 %v1459
      %v1480 = vunpack.c.l.b16 %v1460
      %v1481 = vunpack.c.l.b16 %v1461
      %v1482 = vunpack.c.l.b16 %v1462
      %v1483 = vunpack.c.l.b16 %v1463
      %v1484 = vunpack.c.l.b16 %v1464
      %v1485 = vunpack.c.l.b16 %v1465
      %v1486 = vunpack.c.l.b16 %v1466
      %v1487 = vpack.c.b16 %v1480, %v1479
      %v1488 = vpack.c.b16 %v1482, %v1481
      %v1489 = vpack.c.b16 %v1484, %v1483
      %v1490 = vpack.c.b16 %v1486, %v1485
      %vm1495 = vcmask 523264
      %v1497 = vsel %vm1495, %v1458, 0
      %1499 = vmatpush.bf16.msra.mxu0 0
      %1500 = vmatpush.bf16.msra.mxu0 0
      %1501 = vmatpush.bf16.msra.mxu0 0
      %1502 = vmatpush.bf16.msra.mxu0 0
      %1503 = vmatpush.bf16.msra.mxu0 %v1490
      %1504 = vmatpush.bf16.msra.mxu0 %v1489
      %1505 = vmatpush.bf16.msra.mxu0 %v1488
      %1506 = vmatpush.bf16.msra.mxu0 %v1487
      %1507 = vmatmul.bf16.gmra.mxu0 %v1497
      %v1508 = vpop.f32.mrf.mxu0
      %v1509 = vadd.f32 %v1469, %v1508
      %v1510 = vpop.f32.mrf.mxu0
      %v1511 = vadd.f32 %v1469, %v1510
      %1512 = vdwg.mxu0
      %v1513 = vadd.f32 %v1400, %v1509
      %v1514 = vadd.f32 %v1401, %v1511
      %v1515 = vld [vmem:[%s950] sm:$0x1]
      %v1516 = vld [vmem:[%s953] sm:$0x1]
      %v1517 = vsel %vm1067, %v1513, 0.0
      %1518 = vadd.xlane.f32.xlu0 %v1517
      %v1519 = vpop.xlane.xlu0 %1518
      %v1520 = vsel %vm1067, %v1514, 0.0
      %1521 = vadd.xlane.f32.xlu0 %v1520
      %v1522 = vpop.xlane.xlu0 %1521
      %v1523 = vmul.f32 %v1519, %v1353
      %v1524 = vmul.f32 %v1522, %v1353
      %v1525 = vsub.f32 %v1513, %v1523
      %v1526 = vsub.f32 %v1514, %v1524
      %v1527 = vmul.f32 %v1525, %v1525
      %v1528 = vmul.f32 %v1526, %v1526
      %v1529 = vsel %vm1067, %v1527, 0.0
      %1530 = vadd.xlane.f32.xlu0 %v1529
      %v1531 = vpop.xlane.xlu0 %1530
      %v1532 = vsel %vm1067, %v1528, 0.0
      %1533 = vadd.xlane.f32.xlu0 %v1532
      %v1534 = vpop.xlane.xlu0 %1533
      %v1535 = vmul.f32 %v1531, %v1353
      %v1536 = vmul.f32 %v1534, %v1353
      %v1537 = vadd.f32 %v1535, 1e-12
      %v1538 = vadd.f32 %v1536, 1e-12
      %v1539 = vrsqrt.pop %v1537
      %v1540 = vmul.f32 %v1539, %v1537
      %v1541 = vmul.f32 %v1540, %v1539
      %v1542 = vmul.f32 0.5, %v1541
      %v1543 = vsub.f32 1.5, %v1542
      %v1544 = vmul.f32 %v1539, %v1543
      %vm1545 = vweird.f32 %v1537
      %vm1546 = vweird.f32 %v1539
      %vm1547 = vmor %vm1545, %vm1546
      %v1548 = vsel %vm1547, %v1539, %v1544
      %v1549 = vrsqrt.pop %v1538
      %v1550 = vmul.f32 %v1549, %v1538
      %v1551 = vmul.f32 %v1550, %v1549
      %v1552 = vmul.f32 0.5, %v1551
      %v1553 = vsub.f32 1.5, %v1552
      %v1554 = vmul.f32 %v1549, %v1553
      %vm1555 = vweird.f32 %v1538
      %vm1556 = vweird.f32 %v1549
      %vm1557 = vmor %vm1555, %vm1556
      %v1558 = vsel %vm1557, %v1549, %v1554
      %v1559 = vmul.f32 %v1525, %v1548
      %v1560 = vmul.f32 %v1526, %v1558
      %v1562 = vperm.slane %v1515, 0
      %v1564 = vmul.f32 %v1559, %v1562
      %v1565 = vmul.f32 %v1560, %v1562
      %v1567 = vperm.slane %v1516, 0
      %v1569 = vadd.f32 %v1564, %v1567
      %v1570 = vadd.f32 %v1565, %v1567
      %1571 = vst.msk [vmem:[#allocation2] sm:$0xff] %vm1067, %v1569
      %1572 = vst.msk [vmem:[#allocation2 + $0x8] sm:$0xff] %vm1067, %v1570
      %p1573 = scmp.eq.s32.totalorder %s37, 1
      // Predicated region
      $region109: #{forward.1} parent=103 // pred_check
        %p1574 = pneg %p1573
      $region110: #{forward.1} parent=103 // pred_check_branch
        %1576 = sbr.rel (%p1574) target = $region112
      $region111: #{forward.1} parent=103 // pred_region
        %v1577 = vld [vmem:[%s893] sm:$0x1]
        %vm1578 = vcmp.eq.s32.totalorder %v1577, 1
        %v1579 = vlaneseq
        %v1580 = vshrl.u32 %v1579, 7
        %v1581 = vadd.s32 %v1580, 8
        %vm1582 = vcmp.le.s32.totalorder %v1580, %v1039
        %vm1583 = vcmp.le.s32.totalorder %v1581, %v1039
        %v1584 = vsel %vm1582, 1, 0
        %v1585 = vsel %vm1583, 1, 0
        %v1586 = vcvt.s32.f32 %v1584
        %v1587 = vcvt.s32.f32 %v1585
        %v1588 = vpack.c.bf16 %v1587, %v1586
        %v1589 = vsel %vm1578, 1, 0
        %v1590 = vcvt.s32.f32 %v1589
        %v1591 = vpack.c.bf16 %v1590, %v1590
        %v1593 = vsel %vm1189, %v1591, 0
        %1595 = vmatpush.bf16.msra.mxu0 0
        %1596 = vmatpush.bf16.msra.mxu0 0
        %1597 = vmatpush.bf16.msra.mxu0 0
        %1598 = vmatpush.bf16.msra.mxu0 0
        %1599 = vmatpush.bf16.msra.mxu0 0
        %1600 = vmatpush.bf16.msra.mxu0 0
        %1601 = vmatpush.bf16.msra.mxu0 0
        %1602 = vmatpush.bf16.msra.mxu0 %v1588
        %1603 = vmatmul.bf16.gmra.mxu0 %v1593
        %v1604 = vpop.f32.mrf.mxu0
        %v1605 = vadd.f32 0.0, %v1604
        %v1606 = vpop.f32.mrf.mxu0
        %1607 = vdwg.mxu0
        %v1608 = vcvt.f32.s32.to.zero.pseudo %v1605
        %v1609 = vsub.s32 %v1608, 1
        %v1610 = vperm.slane %v1609, 0
        %vm1611 = vcmp.eq.s32.totalorder %v1580, %v1610
        %vm1612 = vcmp.eq.s32.totalorder %v1581, %v1610
        %v1613 = vperm.slane %v1589, 0
        %vm1614 = vcmp.eq.s32.totalorder %v1613, 1
        %vm1615 = vmand %vm1614, %vm1611
        %vm1616 = vmand %vm1614, %vm1612
        %v1617 = vsel %vm1615, 1, 0
        %v1618 = vsel %vm1616, 1, 0
        %v1619 = vcvt.s32.f32 %v1617
        %v1620 = vcvt.s32.f32 %v1618
        %v1622 = vsel %vm1189, %v1619, 0
        %v1625 = vsel %vm1189, %v1620, 0
        %1627 = vmatpush.msra.mxu0 0.0
        %1628 = vmatpush.msra.mxu0 0.0
        %1629 = vmatpush.msra.mxu0 0.0
        %1630 = vmatpush.msra.mxu0 0.0
        %1631 = vmatpush.msra.mxu0 0.0
        %1632 = vmatpush.msra.mxu0 0.0
        %1633 = vmatpush.msra.mxu0 0.0
        %1634 = vmatpush.msra.mxu0 0.0
        %1635 = vmatpush.msra.mxu0 0.0
        %1636 = vmatpush.msra.mxu0 0.0
        %1637 = vmatpush.msra.mxu0 0.0
        %1638 = vmatpush.msra.mxu0 0.0
        %1639 = vmatpush.msra.mxu0 0.0
        %1640 = vmatpush.msra.mxu0 0.0
        %1641 = vmatpush.msra.mxu0 %v1570
        %1642 = vmatpush.msra.mxu0 %v1569
        %1643 = vmatmul.f32.gmra.mxu0 %v1622
        %v1644 = vpop.f32.mrf.mxu0
        %v1645 = vadd.f32 0.0, %v1644
        %1646 = vmatmul.f32.gmra.mxu0 %v1625
        %v1647 = vpop.f32.mrf.mxu0
        %v1648 = vadd.f32 0.0, %v1647
        %1649 = vdwg.mxu0
        %v1650 = vadd.s32 %v1580, 16
        %v1651 = vadd.s32 %v1580, 24
        %vm1652 = vcmp.eq.s32.totalorder %v1039, %v1580
        %vm1653 = vcmp.eq.s32.totalorder %v1039, %v1581
        %vm1654 = vcmp.eq.s32.totalorder %v1039, %v1650
        %vm1655 = vcmp.eq.s32.totalorder %v1039, %v1651
        %v1656 = vsel %vm1652, 1, 0
        %v1657 = vsel %vm1653, 1, 0
        %v1658 = vsel %vm1654, 1, 0
        %v1659 = vsel %vm1655, 1, 0
        %v1660 = vcvt.s32.f32 %v1656
        %v1661 = vcvt.s32.f32 %v1657
        %v1662 = vcvt.s32.f32 %v1658
        %v1663 = vcvt.s32.f32 %v1659
        %v1664 = vadd.s32 %v1580, 32
        %v1665 = vadd.s32 %v1581, 32
        %v1666 = vadd.s32 %v1650, 32
        %v1667 = vadd.s32 %v1651, 32
        %vm1668 = vcmp.eq.s32.totalorder %v1039, %v1664
        %vm1669 = vcmp.eq.s32.totalorder %v1039, %v1665
        %vm1670 = vcmp.eq.s32.totalorder %v1039, %v1666
        %vm1671 = vcmp.eq.s32.totalorder %v1039, %v1667
        %v1672 = vsel %vm1668, 1, 0
        %v1673 = vsel %vm1669, 1, 0
        %v1674 = vsel %vm1670, 1, 0
        %v1675 = vsel %vm1671, 1, 0
        %v1676 = vcvt.s32.f32 %v1672
        %v1677 = vcvt.s32.f32 %v1673
        %v1678 = vcvt.s32.f32 %v1674
        %v1679 = vcvt.s32.f32 %v1675
        %v1681 = vsel %vm1067, %v1645, 0
        %v1684 = vsel %vm1067, %v1648, 0
        %1686 = vmatpush.msra.mxu0 0.0
        %1687 = vmatpush.msra.mxu0 0.0
        %1688 = vmatpush.msra.mxu0 0.0
        %1689 = vmatpush.msra.mxu0 0.0
        %1690 = vmatpush.msra.mxu0 0.0
        %1691 = vmatpush.msra.mxu0 0.0
        %1692 = vmatpush.msra.mxu0 0.0
        %1693 = vmatpush.msra.mxu0 0.0
        %1694 = vmatpush.msra.mxu0 0.0
        %1695 = vmatpush.msra.mxu0 0.0
        %1696 = vmatpush.msra.mxu0 0.0
        %1697 = vmatpush.msra.mxu0 0.0
        %1698 = vmatpush.msra.mxu0 %v1679
        %1699 = vmatpush.msra.mxu0 %v1678
        %1700 = vmatpush.msra.mxu0 %v1677
        %1701 = vmatpush.msra.mxu0 %v1676
        %1702 = vmatmul.f32.gmra.mxu0 %v1681
        %v1703 = vpop.f32.mrf.mxu0
        %v1704 = vadd.f32 0.0, %v1703
        %1705 = vmatmul.f32.gmra.mxu0 %v1684
        %v1706 = vpop.f32.mrf.mxu0
        %v1707 = vadd.f32 0.0, %v1706
        %1708 = vdwg.mxu0
        %v1710 = vsel %vm1067, %v1569, 0
        %v1713 = vsel %vm1067, %v1570, 0
        %1715 = vmatpush.msra.mxu0 0.0
        %1716 = vmatpush.msra.mxu0 0.0
        %1717 = vmatpush.msra.mxu0 0.0
        %1718 = vmatpush.msra.mxu0 0.0
        %1719 = vmatpush.msra.mxu0 0.0
        %1720 = vmatpush.msra.mxu0 0.0
        %1721 = vmatpush.msra.mxu0 0.0
        %1722 = vmatpush.msra.mxu0 0.0
        %1723 = vmatpush.msra.mxu0 0.0
        %1724 = vmatpush.msra.mxu0 0.0
        %1725 = vmatpush.msra.mxu0 0.0
        %1726 = vmatpush.msra.mxu0 0.0
        %1727 = vmatpush.msra.mxu0 %v1663
        %1728 = vmatpush.msra.mxu0 %v1662
        %1729 = vmatpush.msra.mxu0 %v1661
        %1730 = vmatpush.msra.mxu0 %v1660
        %1731 = vmatmul.f32.gmra.mxu0 %v1710
        %v1732 = vpop.f32.mrf.mxu0
        %v1733 = vadd.f32 %v1704, %v1732
        %1734 = vmatmul.f32.gmra.mxu0 %v1713
        %v1735 = vpop.f32.mrf.mxu0
        %v1736 = vadd.f32 %v1707, %v1735
        %1737 = vdwg.mxu0
        %1738 = vst [vmem:[%s958] sm:$0xff] %v1733
        %1739 = vst [vmem:[%s958 + $0x8] sm:$0xff] %v1736
      $region112: #{forward.1} parent=103 // pred_fallthru
        _
      %s1740 = smul.u32 2, %s36
      %p1741 = scmp.lt.s32.totalorder %s1740, 3
      %s1742 = scalar_select %p1741, %s1740, 3
      %s1743 = smul.addr %s1742, 8
      %s1744 = scalar_lea.vmem %s21, %s1743
      // Predicated region
      $region113: #{forward.1} parent=103 // pred_check
        %p1745 = pneg %p598
      $region114: #{forward.1} parent=103 // pred_check_branch
        %1747 = sbr.rel (%p1745) target = $region116
      $region115: #{forward.1} parent=103 // pred_region
        %s1748 = smul.u32 2, %s36
      $region116: #{forward.1} parent=103 // pred_fallthru
        _
    $region104: #{forward.1} parent=5 // pred_fallthru
      _
    %p1749 = scmp.le.s32.totalorder 2, %s27
    // Predicated region
    $region117: #{forward.1} parent=5 // pred_check
      %p1750 = pneg %p1749
    $region118: #{forward.1} parent=5 // pred_check_branch
      %1752 = sbr.rel (%p1750) target = $region120
    $region119: #{forward.1} parent=5 // pred_region
      %s1753 = ssub.s32 %s27, 2
      // Predicated region
      $region121: #{forward.1} parent=119 // pred_check
        %p1754 = pneg %p604
      $region122: #{forward.1} parent=119 // pred_check_branch
        %1756 = sbr.rel (%p1754) target = $region124
      $region123: #{forward.1} parent=119 // pred_region
        %s1757 = smul.u32 2, %s38
        %p1758 = scmp.lt.s32.totalorder %s1757, 3
        %s1759 = scalar_select %p1758, %s1757, 3
        %s1760 = smul.addr %s1759, 8
        %s1761 = scalar_lea.vmem %s21, %s1760
      $region124: #{forward.1} parent=119 // pred_fallthru
        _
    $region120: #{forward.1} parent=5 // pred_fallthru
      _
  $region6: #{forward.1} parent=0 // loop_footer
    %s31 = sadd.s32 1, %s27
  $region7: #{forward.1} parent=0 // loop_footer_branch
    %26 = sbr.rel target = $region3
  $region8: #{forward.1} parent=0 // loop_exit
    _

</llo_original>
